<compile_context>
chip_gen: v7x
topology: tpu7x:2x2x1
jax: 0.10.0
libtpu: 0.0.40
codegen_flags: <defaults>
</compile_context>

<pallas_src>
import math

import jax
import jax.numpy as jnp
import numpy as np
from jax.experimental import pallas as pl
from jax.experimental.pallas import tpu as pltpu

# Hyper-parameters fixed by the PyTorch module definition.
C_IN = 40     # cn1 in channels
C1 = 46       # cn1 out channels
C2 = 46       # cn2 out channels
K1 = 10       # cn1 kernel size
K2 = 2        # cn2 kernel size
P2 = 5        # cn2 padding
D_LIN = 46    # ln1 in/out features

# Channel dims padded to a multiple of 16 so every bf16 im2col piece is aligned
# to the packed-sublane tiling (concat becomes aligned copies).
C_IN_P = 48   # padded cn1 in channels  (extra channels are zero)
C1_P = 48     # padded cn1 out channels (extra rows have zero weight/bias -> 0)


def _round_up(a, b):
    return -(-a // b) * b


def _vmem_capacity_bytes():
    """Physical VMEM of the local TPU (fallback: conservative v7x 64 MiB)."""
    try:
        v = getattr(pltpu.get_tpu_info(), "vmem_capacity_bytes", None)
        if v:
            return int(v)
    except Exception:
        pass
    return 64 << 20


def _min_grid_steps():
    """Minimum grid steps to target: >=4 on multi-TensorCore chips (v7x dual TC,
    v4/v5p megacore) so the 'parallel' batch axis shards across cores AND each
    core still double-buffers; single-TC parts (v5e/v6e) prefer 1 fat tile."""
    try:
        kind = jax.devices()[0].device_kind.lower()
    except Exception:
        return 4
    single_tc = any(t in kind for t in
                    ("v5e", "v5 lite", "v5lite", "v6e", "v6 lite", "v6lite"))
    return 1 if single_tc else 4


def _pick_tb(n, lp, g, vmem_bytes, min_steps):
    """Batch-tile size: VMEM-aware, lane-dense, multiple of g (keeps W%128==0).

    Per-lane VMEM residency (double-buffered streamed blocks + im2col and
    activation intermediates + bf16 seg) is ~2.3 KB; 3.5 KB/lane with a 2x
    budget factor leaves headroom for compiler scratch on v7x's 64 MiB VMEM.
    """
    per_lane = 3584
    w_cap = max(128, (vmem_bytes // 2) // per_lane)   # VMEM-safe lane width
    w_target = 4096 if min_steps <= 1 else 2048       # amortize ~0.35us/step
    tb = max(g, (min(w_cap, w_target) // lp) // g * g)
    tb = min(tb, _round_up(n, g))                     # don't exceed padded batch
    if min_steps > 1 and n >= min_steps * g:          # keep >=min_steps steps
        tb = min(tb, max(g, (n // min_steps) // g * g))
    return tb


def cnn_forward_kernel(x_ref, m_ref, inv_ref, valid_ref, seg_ref,
                       w1_ref, b1_ref, w2_ref, b2_ref, wl_ref, bl_ref, out_ref):
    # W = TB*Lp: TB samples laid side-by-side along the lane axis.
    x = x_ref[0]                 # (C_IN_P, W) bf16
    m = m_ref[0]                 # (1, W)      f32 pooling mask
    inv_msum = inv_ref[0]        # (1, TB)     f32 host-precomputed 1/max(msum,1)
    valid = valid_ref[...]       # (1, W)      f32: 1.0 on the L1 valid conv1 cols
    seg = seg_ref[...]           # (W, TB)     bf16 one-hot per-sample segments
    num_lanes = x.shape[-1]

    # ---- Conv1d #1 (k=10, pad=0) as ONE im2col matmul + ReLU -------------
    # rhs1 row (k*C_IN_P + c), col i  ==  x[c, i+k] (circular).  For valid
    # output columns (j < L1 inside a sample) this never crosses a sample
    # boundary.  Rotations in f32 (native 32-bit XLU rotate); pieces downcast
    # so the materialized rhs1 buffer is bf16 (half the vector stores).
    x32 = x.astype(jnp.float32)
    pieces1 = [x] + [pltpu.roll(x32, shift=num_lanes - k, axis=1)
                     .astype(jnp.bfloat16) for k in range(1, K1)]
    rhs1 = jnp.concatenate(pieces1, axis=0)                     # (K1*C_IN_P, W) bf16
    acc1 = jnp.dot(w1_ref[...], rhs1,
                   preferred_element_type=jnp.float32)          # (C1_P, W) f32
    # ReLU, then zero the K1-1 garbage tail columns of every sample; that tail
    # doubles as conv2's zero padding (P2 <= K1-1 asserted in the wrapper).
    h1 = jnp.maximum(acc1 + b1_ref[...], 0.0) * valid           # (C1_P, W) f32

    # ---- Conv1d #2 (k=2, pad=5) as ONE im2col matmul + ReLU --------------
    # Tap k needs h1 shifted right by (P2 - k); wrapped / cross-sample columns
    # land in the zeroed tail, i.e. they read the implicit zero padding.
    pieces2 = [pltpu.roll(h1, shift=P2 - k, axis=1).astype(jnp.bfloat16)
               for k in range(K2)]
    rhs2 = jnp.concatenate(pieces2, axis=0)                     # (K2*C1_P, W) bf16
    acc2 = jnp.dot(w2_ref[...], rhs2,
                   preferred_element_type=jnp.float32)          # (C2, W) f32
    h2 = jnp.maximum(acc2 + b2_ref[...], 0.0)                   # (C2, W) f32

    # ---- masked average pool per sample: one bf16 matmul + scale ---------
    mul_sum = jnp.dot((h2 * m).astype(jnp.bfloat16), seg,
                      preferred_element_type=jnp.float32)       # (C2, TB)
    pooled = mul_sum * inv_msum                                 # (C2, TB) f32

    # ---- Linear(46, 46): y = W @ pooled + b (tiny, keep f32) -------------
    out_ref[0] = jnp.dot(wl_ref[...], pooled,
                         preferred_element_type=jnp.float32) + bl_ref[...]


def cnn_forward(x, mask, params, tb=None):
    """x: (N, 40, L) float; mask: (N, L) float. Returns (N, 46) float32."""
    w1, b1, w2, b2, wl, bl = params
    n, c_in, length = x.shape
    assert c_in == C_IN and length >= K1
    l1 = length - K1 + 1
    l2 = l1 + 2 * P2 - K2 + 1
    assert l2 == length        # mask lines up with the conv2 output length
    assert P2 <= K1 - 1        # wrapped im2col reads must land in the zeroed tail

    # Pad each sample's length to a multiple of 16 so tb (a multiple of g below)
    # keeps W = tb*Lp a multiple of 128 (lane-dense tiles, clean rotations).
    lp = _round_up(length, 16)
    g = 128 // math.gcd(lp, 128)       # smallest tb granularity with W%128 == 0

    vmem_cap = _vmem_capacity_bytes()
    if tb is None:
        tb = _pick_tb(n, lp, g, vmem_cap, _min_grid_steps())
    tb = _round_up(max(int(tb), g), g)
    n_tiles = -(-n // tb)
    n_pad = n_tiles * tb
    w_lanes = tb * lp

    x32 = x.astype(jnp.float32)
    m32 = mask.astype(jnp.float32)
    x32 = jnp.pad(x32, ((0, n_pad - n), (0, C_IN_P - C_IN), (0, lp - length)))
    m32 = jnp.pad(m32, ((0, n_pad - n), (0, lp - length)))

    # Lay tb samples side-by-side on the lane axis, streamed as bf16:
    # (n_tiles, C_IN_P, tb*Lp).
    x_g = (x32.astype(jnp.bfloat16)
              .reshape(n_tiles, tb, C_IN_P, lp)
              .transpose(0, 2, 1, 3)
              .reshape(n_tiles, C_IN_P, w_lanes))
    m_g = m32.reshape(n_tiles, 1, w_lanes)

    # Host-precomputed per-sample pooling reciprocal (replaces the in-kernel
    # mask-sum matmul + compare + divide).
    msum = jnp.sum(m32, axis=1)
    inv_g = (1.0 / jnp.where(msum == 0.0, 1.0, msum)).astype(jnp.float32)
    inv_g = inv_g.reshape(n_tiles, 1, tb)

    # Constant helper operands (constant index_map -> fetched into VMEM once).
    col = np.arange(w_lanes)
    valid = jnp.asarray((col % lp < l1).astype(np.float32).reshape(1, w_lanes))
    seg = jnp.asarray((col[:, None] // lp == np.arange(tb)[None, :])
                      .astype(np.float32), dtype=jnp.bfloat16)   # exact 0/1

    # Conv weights, zero-padded to the aligned channel counts and flattened for
    # the im2col matmuls (k-major, channel-minor rows); bf16 MXU operands.
    w1p = jnp.pad(w1, ((0, C1_P - C1), (0, C_IN_P - C_IN), (0, 0)))
    w1f = jnp.transpose(w1p, (0, 2, 1)).reshape(C1_P, K1 * C_IN_P).astype(jnp.bfloat16)
    b1c = jnp.pad(b1, ((0, C1_P - C1),)).reshape(C1_P, 1).astype(jnp.float32)
    w2p = jnp.pad(w2, ((0, 0), (0, C1_P - C1), (0, 0)))
    w2f = jnp.transpose(w2p, (0, 2, 1)).reshape(C2, K2 * C1_P).astype(jnp.bfloat16)
    b2c = b2.reshape(C2, 1).astype(jnp.float32)
    wlc = wl.astype(jnp.float32)
    blc = bl.reshape(D_LIN, 1).astype(jnp.float32)

    flops = (2 * n_pad * lp * (K1 * C_IN_P * C1_P + K2 * C1_P * C2 + 2 * C2)
             + 2 * n_pad * D_LIN * D_LIN)
    bytes_accessed = (x_g.size * 2 + m_g.size * 4 + inv_g.size * 4
                      + valid.size * 4 + seg.size * 2
                      + w1f.size * 2 + w2f.size * 2
                      + (b1c.size + b2c.size + wlc.size + blc.size) * 4
                      + n_tiles * D_LIN * tb * 4)

    grid_spec = pltpu.PrefetchScalarGridSpec(
        num_scalar_prefetch=0,
        grid=(n_tiles,),
        in_specs=[
            pl.BlockSpec((1, C_IN_P, w_lanes), lambda t: (t, 0, 0)),  # x (bf16)
            pl.BlockSpec((1, 1, w_lanes), lambda t: (t, 0, 0)),       # mask
            pl.BlockSpec((1, 1, tb), lambda t: (t, 0, 0)),            # 1/mask_sum
            pl.BlockSpec((1, w_lanes), lambda t: (0, 0)),             # valid cols
            pl.BlockSpec((w_lanes, tb), lambda t: (0, 0)),            # segments
            pl.BlockSpec((C1_P, K1 * C_IN_P), lambda t: (0, 0)),      # w1 (im2col)
            pl.BlockSpec((C1_P, 1), lambda t: (0, 0)),                # b1
            pl.BlockSpec((C2, K2 * C1_P), lambda t: (0, 0)),          # w2 (im2col)
            pl.BlockSpec((C2, 1), lambda t: (0, 0)),                  # b2
            pl.BlockSpec((D_LIN, D_LIN), lambda t: (0, 0)),           # ln1 weight
            pl.BlockSpec((D_LIN, 1), lambda t: (0, 0)),               # ln1 bias
        ],
        out_specs=pl.BlockSpec((1, D_LIN, tb), lambda t: (t, 0, 0)),
    )
    out = pl.pallas_call(
        cnn_forward_kernel,
        out_shape=jax.ShapeDtypeStruct((n_tiles, D_LIN, tb), jnp.float32),
        grid_spec=grid_spec,
        compiler_params=pltpu.CompilerParams(
            dimension_semantics=("parallel",),
            vmem_limit_bytes=int(vmem_cap * 3 // 4)),
        cost_estimate=pl.CostEstimate(flops=int(flops), transcendentals=0,
                                      bytes_accessed=int(bytes_accessed)),
    )(x_g, m_g, inv_g, valid, seg, w1f, b1c, w2f, b2c, wlc, blc)

    # (n_tiles, D_LIN, tb) -> (n_pad, D_LIN) -> drop batch padding.
    return out.transpose(0, 2, 1).reshape(n_pad, D_LIN)[:n]


def init_params(key):
    """Deterministic init matching the module's shapes (xavier_normal convs)."""
    k1, k2, k3, k4, k5, k6 = jax.random.split(key, 6)
    std1 = float(np.sqrt(2.0 / (C_IN * K1 + C1 * K1)))
    w1 = std1 * jax.random.normal(k1, (C1, C_IN, K1), jnp.float32)
    std2 = float(np.sqrt(2.0 / (C1 * K2 + C2 * K2)))
    w2 = std2 * jax.random.normal(k2, (C2, C1, K2), jnp.float32)
    b1 = jax.random.uniform(k3, (C1,), jnp.float32,
                            -1.0 / np.sqrt(C_IN * K1), 1.0 / np.sqrt(C_IN * K1))
    b2 = jax.random.uniform(k4, (C2,), jnp.float32,
                            -1.0 / np.sqrt(C1 * K2), 1.0 / np.sqrt(C1 * K2))
    bound = 1.0 / np.sqrt(D_LIN)
    wl = jax.random.uniform(k5, (D_LIN, D_LIN), jnp.float32, -bound, bound)
    bl = jax.random.uniform(k6, (D_LIN,), jnp.float32, -bound, bound)
    return (w1, b1, w2, b2, wl, bl)


def ref_forward(x, mask, params):
    """Plain-JAX reference with the exact PyTorch forward semantics (in f32)."""
    w1, b1, w2, b2, wl, bl = params
    dn = ('NCH', 'OIH', 'NCH')
    out = jax.lax.conv_general_dilated(x, w1, (1,), [(0, 0)],
                                       dimension_numbers=dn,
                                       precision=jax.lax.Precision.HIGHEST)
    out = jnp.maximum(out + b1[None, :, None], 0.0)
    out = jax.lax.conv_general_dilated(out, w2, (1,), [(P2, P2)],
                                       dimension_numbers=dn,
                                       precision=jax.lax.Precision.HIGHEST)
    out = jnp.maximum(out + b2[None, :, None], 0.0)
    mul_sum = jnp.sum(mask[:, None, :] * out, axis=2)
    mask_sum = jnp.sum(mask, axis=1)
    mask_sum = jnp.where(mask_sum == 0.0, 1.0, mask_sum)
    pooled = mul_sum / mask_sum[:, None]
    return pooled @ wl.T + bl[None, :]


if __name__ == "__main__":
    key = jax.random.PRNGKey(0)
    kx, km, kp = jax.random.split(key, 3)

    # mask length == cn2 output length == L.  tb=16 forces a multi-step grid
    # (3 steps) and exercises the batch-padding path (40 -> 48) at W=256 lanes.
    N, L = 40, 16
    x = jax.random.normal(kx, (N, C_IN, L), jnp.float32)
    mask = jax.random.bernoulli(km, 0.7, (N, L)).astype(jnp.float32)
    params = init_params(kp)

    out = jax.block_until_ready(cnn_forward(x, mask, params, tb=16))

    ref = ref_forward(x, mask, params)
    assert out.shape == (N, D_LIN), out.shape
    # Tolerance 3e-2: conv and pooling matmuls use bf16 MXU operands (f32
    # accumulation), which introduces a few-per-mille relative error vs. the
    # pure-f32 reference (PyTorch additionally runs pool/ln1 in f64).
    np.testing.assert_allclose(np.asarray(out), np.asarray(ref),
                               rtol=3e-2, atol=3e-2)
    print("KERNEL_OK")
</pallas_src>

<mosaic_0001>
module attributes {stable_mosaic.version = 11 : i64} {
  func.func @cnn_forward_kernel(%arg0: i32, %arg1: memref<1x48x256xbf16, #tpu.memory_space<vmem>>, %arg2: memref<1x1x256xf32, #tpu.memory_space<vmem>>, %arg3: memref<1x1x16xf32, #tpu.memory_space<vmem>>, %arg4: memref<1x256xf32, #tpu.memory_space<vmem>>, %arg5: memref<256x16xbf16, #tpu.memory_space<vmem>>, %arg6: memref<48x480xbf16, #tpu.memory_space<vmem>>, %arg7: memref<48x1xf32, #tpu.memory_space<vmem>>, %arg8: memref<46x96xbf16, #tpu.memory_space<vmem>>, %arg9: memref<46x1xf32, #tpu.memory_space<vmem>>, %arg10: memref<46x46xf32, #tpu.memory_space<vmem>>, %arg11: memref<46x1xf32, #tpu.memory_space<vmem>>, %arg12: memref<1x46x16xf32, #tpu.memory_space<vmem>>) attributes {dimension_semantics = [#tpu.dimension_semantics<parallel>], iteration_bounds = array<i64: 3>, scalar_prefetch = 0 : i64, scratch_operands = 0 : i64, tpu.core_type = #tpu.core_type<tc>, window_params = [{transform_indices = @transform_0, window_bounds = array<i64: 1, 48, 256>}, {transform_indices = @transform_1, window_bounds = array<i64: 1, 1, 256>}, {transform_indices = @transform_2, window_bounds = array<i64: 1, 1, 16>}, {pipeline_mode = #tpu.pipeline_mode<synchronous>, transform_indices = @transform_3, window_bounds = array<i64: 1, 256>}, {pipeline_mode = #tpu.pipeline_mode<synchronous>, transform_indices = @transform_4, window_bounds = array<i64: 256, 16>}, {pipeline_mode = #tpu.pipeline_mode<synchronous>, transform_indices = @transform_5, window_bounds = array<i64: 48, 480>}, {pipeline_mode = #tpu.pipeline_mode<synchronous>, transform_indices = @transform_6, window_bounds = array<i64: 48, 1>}, {pipeline_mode = #tpu.pipeline_mode<synchronous>, transform_indices = @transform_7, window_bounds = array<i64: 46, 96>}, {pipeline_mode = #tpu.pipeline_mode<synchronous>, transform_indices = @transform_8, window_bounds = array<i64: 46, 1>}, {pipeline_mode = #tpu.pipeline_mode<synchronous>, transform_indices = @transform_9, window_bounds = array<i64: 46, 46>}, {pipeline_mode = #tpu.pipeline_mode<synchronous>, transform_indices = @transform_10, window_bounds = array<i64: 46, 1>}, {transform_indices = @transform_11, window_bounds = array<i64: 1, 46, 16>}]} {
    %c0 = arith.constant 0 : index
    %c0_0 = arith.constant 0 : index
    %c0_1 = arith.constant 0 : index
    %0 = vector.load %arg1[%c0, %c0_0, %c0_1] : memref<1x48x256xbf16, #tpu.memory_space<vmem>>, vector<1x48x256xbf16>
    %1 = vector.shape_cast %0 : vector<1x48x256xbf16> to vector<48x256xbf16>
    %c0_2 = arith.constant 0 : index
    %c0_3 = arith.constant 0 : index
    %c0_4 = arith.constant 0 : index
    %2 = vector.load %arg2[%c0_2, %c0_3, %c0_4] : memref<1x1x256xf32, #tpu.memory_space<vmem>>, vector<1x1x256xf32>
    %3 = vector.shape_cast %2 : vector<1x1x256xf32> to vector<1x256xf32>
    %c0_5 = arith.constant 0 : index
    %c0_6 = arith.constant 0 : index
    %c0_7 = arith.constant 0 : index
    %4 = vector.load %arg3[%c0_5, %c0_6, %c0_7] : memref<1x1x16xf32, #tpu.memory_space<vmem>>, vector<1x1x16xf32>
    %5 = vector.shape_cast %4 : vector<1x1x16xf32> to vector<1x16xf32>
    %c0_8 = arith.constant 0 : index
    %c0_9 = arith.constant 0 : index
    %6 = vector.load %arg4[%c0_8, %c0_9] : memref<1x256xf32, #tpu.memory_space<vmem>>, vector<1x256xf32>
    %c0_10 = arith.constant 0 : index
    %c0_11 = arith.constant 0 : index
    %7 = vector.load %arg5[%c0_10, %c0_11] : memref<256x16xbf16, #tpu.memory_space<vmem>>, vector<256x16xbf16>
    %8 = arith.extf %1 : vector<48x256xbf16> to vector<48x256xf32>
    %c255_i32 = arith.constant 255 : i32
    %9 = tpu.dynamic_rotate %8 by %c255_i32 dim 1 : vector<48x256xf32>, i32 -> vector<48x256xf32>
    %10 = arith.truncf %9 : vector<48x256xf32> to vector<48x256xbf16>
    %c254_i32 = arith.constant 254 : i32
    %11 = tpu.dynamic_rotate %8 by %c254_i32 dim 1 : vector<48x256xf32>, i32 -> vector<48x256xf32>
    %12 = arith.truncf %11 : vector<48x256xf32> to vector<48x256xbf16>
    %c253_i32 = arith.constant 253 : i32
    %13 = tpu.dynamic_rotate %8 by %c253_i32 dim 1 : vector<48x256xf32>, i32 -> vector<48x256xf32>
    %14 = arith.truncf %13 : vector<48x256xf32> to vector<48x256xbf16>
    %c252_i32 = arith.constant 252 : i32
    %15 = tpu.dynamic_rotate %8 by %c252_i32 dim 1 : vector<48x256xf32>, i32 -> vector<48x256xf32>
    %16 = arith.truncf %15 : vector<48x256xf32> to vector<48x256xbf16>
    %c251_i32 = arith.constant 251 : i32
    %17 = tpu.dynamic_rotate %8 by %c251_i32 dim 1 : vector<48x256xf32>, i32 -> vector<48x256xf32>
    %18 = arith.truncf %17 : vector<48x256xf32> to vector<48x256xbf16>
    %c250_i32 = arith.constant 250 : i32
    %19 = tpu.dynamic_rotate %8 by %c250_i32 dim 1 : vector<48x256xf32>, i32 -> vector<48x256xf32>
    %20 = arith.truncf %19 : vector<48x256xf32> to vector<48x256xbf16>
    %c249_i32 = arith.constant 249 : i32
    %21 = tpu.dynamic_rotate %8 by %c249_i32 dim 1 : vector<48x256xf32>, i32 -> vector<48x256xf32>
    %22 = arith.truncf %21 : vector<48x256xf32> to vector<48x256xbf16>
    %c248_i32 = arith.constant 248 : i32
    %23 = tpu.dynamic_rotate %8 by %c248_i32 dim 1 : vector<48x256xf32>, i32 -> vector<48x256xf32>
    %24 = arith.truncf %23 : vector<48x256xf32> to vector<48x256xbf16>
    %c247_i32 = arith.constant 247 : i32
    %25 = tpu.dynamic_rotate %8 by %c247_i32 dim 1 : vector<48x256xf32>, i32 -> vector<48x256xf32>
    %26 = arith.truncf %25 : vector<48x256xf32> to vector<48x256xbf16>
    %27 = tpu.concatenate %1, %10, %12, %14, %16, %18, %20, %22, %24, %26 in 0 : vector<48x256xbf16>, vector<48x256xbf16>, vector<48x256xbf16>, vector<48x256xbf16>, vector<48x256xbf16>, vector<48x256xbf16>, vector<48x256xbf16>, vector<48x256xbf16>, vector<48x256xbf16>, vector<48x256xbf16> -> vector<480x256xbf16>
    %c0_12 = arith.constant 0 : index
    %c0_13 = arith.constant 0 : index
    %28 = vector.load %arg6[%c0_12, %c0_13] : memref<48x480xbf16, #tpu.memory_space<vmem>>, vector<48x480xbf16>
    %cst = arith.constant dense<0.000000e+00> : vector<48x256xf32>
    %29 = tpu.matmul %28, %27, %cst {dimension_numbers = #tpu.dot_dimension_numbers<[1], [0], [0], [1], [0, 0, 1, 1], [], []>} : vector<48x480xbf16>, vector<480x256xbf16>, vector<48x256xf32> -> vector<48x256xf32>
    %c0_14 = arith.constant 0 : index
    %c0_15 = arith.constant 0 : index
    %30 = vector.load %arg7[%c0_14, %c0_15] : memref<48x1xf32, #tpu.memory_space<vmem>>, vector<48x1xf32>
    %31 = vector.broadcast %30 : vector<48x1xf32> to vector<48x256xf32>
    %32 = arith.addf %29, %31 : vector<48x256xf32>
    %cst_16 = arith.constant 0.000000e+00 : f32
    %33 = vector.broadcast %cst_16 : f32 to vector<48x256xf32>
    %34 = arith.maximumf %32, %33 : vector<48x256xf32>
    %35 = vector.broadcast %6 : vector<1x256xf32> to vector<48x256xf32>
    %36 = arith.mulf %34, %35 : vector<48x256xf32>
    %c5_i32 = arith.constant 5 : i32
    %37 = tpu.dynamic_rotate %36 by %c5_i32 dim 1 : vector<48x256xf32>, i32 -> vector<48x256xf32>
    %38 = arith.truncf %37 : vector<48x256xf32> to vector<48x256xbf16>
    %c4_i32 = arith.constant 4 : i32
    %39 = tpu.dynamic_rotate %36 by %c4_i32 dim 1 : vector<48x256xf32>, i32 -> vector<48x256xf32>
    %40 = arith.truncf %39 : vector<48x256xf32> to vector<48x256xbf16>
    %41 = tpu.concatenate %38, %40 in 0 : vector<48x256xbf16>, vector<48x256xbf16> -> vector<96x256xbf16>
    %c0_17 = arith.constant 0 : index
    %c0_18 = arith.constant 0 : index
    %42 = vector.load %arg8[%c0_17, %c0_18] : memref<46x96xbf16, #tpu.memory_space<vmem>>, vector<46x96xbf16>
    %cst_19 = arith.constant dense<0.000000e+00> : vector<46x256xf32>
    %43 = tpu.matmul %42, %41, %cst_19 {dimension_numbers = #tpu.dot_dimension_numbers<[1], [0], [0], [1], [0, 0, 1, 1], [], []>} : vector<46x96xbf16>, vector<96x256xbf16>, vector<46x256xf32> -> vector<46x256xf32>
    %c0_20 = arith.constant 0 : index
    %c0_21 = arith.constant 0 : index
    %44 = vector.load %arg9[%c0_20, %c0_21] : memref<46x1xf32, #tpu.memory_space<vmem>>, vector<46x1xf32>
    %45 = vector.broadcast %44 : vector<46x1xf32> to vector<46x256xf32>
    %46 = arith.addf %43, %45 : vector<46x256xf32>
    %cst_22 = arith.constant 0.000000e+00 : f32
    %47 = vector.broadcast %cst_22 : f32 to vector<46x256xf32>
    %48 = arith.maximumf %46, %47 : vector<46x256xf32>
    %49 = vector.broadcast %3 : vector<1x256xf32> to vector<46x256xf32>
    %50 = arith.mulf %48, %49 : vector<46x256xf32>
    %51 = arith.truncf %50 : vector<46x256xf32> to vector<46x256xbf16>
    %cst_23 = arith.constant dense<0.000000e+00> : vector<46x16xf32>
    %52 = tpu.matmul %51, %7, %cst_23 {dimension_numbers = #tpu.dot_dimension_numbers<[1], [0], [0], [1], [0, 0, 1, 1], [], []>} : vector<46x256xbf16>, vector<256x16xbf16>, vector<46x16xf32> -> vector<46x16xf32>
    %53 = vector.broadcast %5 : vector<1x16xf32> to vector<46x16xf32>
    %54 = arith.mulf %52, %53 : vector<46x16xf32>
    %c0_24 = arith.constant 0 : index
    %c0_25 = arith.constant 0 : index
    %55 = vector.load %arg10[%c0_24, %c0_25] : memref<46x46xf32, #tpu.memory_space<vmem>>, vector<46x46xf32>
    %cst_26 = arith.constant dense<0.000000e+00> : vector<46x16xf32>
    %56 = tpu.matmul %55, %54, %cst_26 {dimension_numbers = #tpu.dot_dimension_numbers<[1], [0], [0], [1], [0, 0, 1, 1], [], []>} : vector<46x46xf32>, vector<46x16xf32>, vector<46x16xf32> -> vector<46x16xf32>
    %c0_27 = arith.constant 0 : index
    %c0_28 = arith.constant 0 : index
    %57 = vector.load %arg11[%c0_27, %c0_28] : memref<46x1xf32, #tpu.memory_space<vmem>>, vector<46x1xf32>
    %58 = vector.broadcast %57 : vector<46x1xf32> to vector<46x16xf32>
    %59 = arith.addf %56, %58 : vector<46x16xf32>
    %c0_29 = arith.constant 0 : index
    %c0_30 = arith.constant 0 : index
    %c0_31 = arith.constant 0 : index
    %60 = vector.load %arg12[%c0_29, %c0_30, %c0_31] : memref<1x46x16xf32, #tpu.memory_space<vmem>>, vector<1x46x16xf32>
    %61 = vector.shape_cast %60 : vector<1x46x16xf32> to vector<46x16xf32>
    %62 = vector.shape_cast %59 : vector<46x16xf32> to vector<1x46x16xf32>
    tpu.vector_store %arg12[%c0_29, %c0_30, %c0_31], %62 {strides = array<i32>} : memref<1x46x16xf32, #tpu.memory_space<vmem>>, vector<1x46x16xf32>,
    return
  }
  func.func @transform_0(%arg0: i32) -> (i32, i32, i32) {
    %c0_i32 = arith.constant 0 : i32
    %c0_i32_0 = arith.constant 0 : i32
    %c0_i32_1 = arith.constant 0 : i32
    return %arg0, %c0_i32, %c0_i32_0 : i32, i32, i32
  }
  func.func @transform_1(%arg0: i32) -> (i32, i32, i32) {
    %c0_i32 = arith.constant 0 : i32
    %c0_i32_0 = arith.constant 0 : i32
    %c0_i32_1 = arith.constant 0 : i32
    return %arg0, %c0_i32, %c0_i32_0 : i32, i32, i32
  }
  func.func @transform_2(%arg0: i32) -> (i32, i32, i32) {
    %c0_i32 = arith.constant 0 : i32
    %c0_i32_0 = arith.constant 0 : i32
    %c0_i32_1 = arith.constant 0 : i32
    return %arg0, %c0_i32, %c0_i32_0 : i32, i32, i32
  }
  func.func @transform_3(%arg0: i32) -> (i32, i32) {
    %c0_i32 = arith.constant 0 : i32
    %c0_i32_0 = arith.constant 0 : i32
    %c0_i32_1 = arith.constant 0 : i32
    return %c0_i32, %c0_i32_0 : i32, i32
  }
  func.func @transform_4(%arg0: i32) -> (i32, i32) {
    %c0_i32 = arith.constant 0 : i32
    %c0_i32_0 = arith.constant 0 : i32
    %c0_i32_1 = arith.constant 0 : i32
    return %c0_i32, %c0_i32_0 : i32, i32
  }
  func.func @transform_5(%arg0: i32) -> (i32, i32) {
    %c0_i32 = arith.constant 0 : i32
    %c0_i32_0 = arith.constant 0 : i32
    %c0_i32_1 = arith.constant 0 : i32
    return %c0_i32, %c0_i32_0 : i32, i32
  }
  func.func @transform_6(%arg0: i32) -> (i32, i32) {
    %c0_i32 = arith.constant 0 : i32
    %c0_i32_0 = arith.constant 0 : i32
    %c0_i32_1 = arith.constant 0 : i32
    return %c0_i32, %c0_i32_0 : i32, i32
  }
  func.func @transform_7(%arg0: i32) -> (i32, i32) {
    %c0_i32 = arith.constant 0 : i32
    %c0_i32_0 = arith.constant 0 : i32
    %c0_i32_1 = arith.constant 0 : i32
    return %c0_i32, %c0_i32_0 : i32, i32
  }
  func.func @transform_8(%arg0: i32) -> (i32, i32) {
    %c0_i32 = arith.constant 0 : i32
    %c0_i32_0 = arith.constant 0 : i32
    %c0_i32_1 = arith.constant 0 : i32
    return %c0_i32, %c0_i32_0 : i32, i32
  }
  func.func @transform_9(%arg0: i32) -> (i32, i32) {
    %c0_i32 = arith.constant 0 : i32
    %c0_i32_0 = arith.constant 0 : i32
    %c0_i32_1 = arith.constant 0 : i32
    return %c0_i32, %c0_i32_0 : i32, i32
  }
  func.func @transform_10(%arg0: i32) -> (i32, i32) {
    %c0_i32 = arith.constant 0 : i32
    %c0_i32_0 = arith.constant 0 : i32
    %c0_i32_1 = arith.constant 0 : i32
    return %c0_i32, %c0_i32_0 : i32, i32
  }
  func.func @transform_11(%arg0: i32) -> (i32, i32, i32) {
    %c0_i32 = arith.constant 0 : i32
    %c0_i32_0 = arith.constant 0 : i32
    %c0_i32_1 = arith.constant 0 : i32
    return %arg0, %c0_i32, %c0_i32_0 : i32, i32, i32
  }
}

</mosaic_0001>

<llo_original>
// kernel: tpu_custom_call.1
$region0: #{tpu_custom_call.1}
  #allocation0 [shape = 'u32[]', space=smem, size = 0x4, offset = 0x4, fixed_abs, tag = 'smem constant byte address 0x4 - core index']
  #allocation1 [shape = 'u32[144,128]{1,0:T(1,128)}', space=vmem, size = 0x12000, scoped, tag = 'internal scratch']
  %s0 = inlined_call_operand.vmem [shape: bf16[3,48,256], index: 0, kind: input, shape index: {}]
  %s1 = inlined_call_operand.hbm [shape: f32[3,1,256], index: 1, kind: input, shape index: {}]
  %s2 = inlined_call_operand.hbm [shape: f32[3,1,16], index: 2, kind: input, shape index: {}]
  %s3 = inlined_call_operand.hbm [shape: f32[1,256], index: 3, kind: input, shape index: {}]
  %s4 = inlined_call_operand.vmem [shape: bf16[256,16], index: 4, kind: input, shape index: {}]
  %s5 = inlined_call_operand.vmem [shape: bf16[48,480], index: 5, kind: input, shape index: {}]
  %s6 = inlined_call_operand.vmem [shape: f32[48,1], index: 6, kind: input, shape index: {}]
  %s7 = inlined_call_operand.vmem [shape: bf16[46,96], index: 7, kind: input, shape index: {}]
  %s8 = inlined_call_operand.vmem [shape: f32[46,1], index: 8, kind: input, shape index: {}]
  %s9 = inlined_call_operand.vmem [shape: f32[46,46], index: 9, kind: input, shape index: {}]
  %s10 = inlined_call_operand.vmem [shape: f32[46,1], index: 10, kind: input, shape index: {}]
  %s11 = inlined_call_operand.vmem [shape: f32[3,46,16], index: 11, kind: output, shape index: {}]
  %s12 = sld [smem:[#allocation0]]
  $region89: #{tpu_custom_call.1} parent=0
    _
  %s14 = ssub.s32 1, %s12
  %s15 = scalar_select 0, %s14, %s12
  $region1: #{tpu_custom_call.1} parent=0
    #allocation2 [shape = 'u8[2048]{0}', space=vmem, size = 0x800, scoped, tag = 'input window, operand 1']
    #allocation3 [shape = 's32[2]{0}', space=sflag, size = 0x8, scoped, tag = 'scoped memory for tpu_custom_call.1']
    #allocation4 [shape = 'u8[1024]{0}', space=vmem, size = 0x400, scoped, tag = 'input window, operand 2']
    #allocation5 [shape = 's32[2]{0}', space=sflag, size = 0x8, scoped, tag = 'scoped memory for tpu_custom_call.1']
    #allocation6 [shape = 'u8[1024]{0}', space=vmem, size = 0x400, scoped, tag = 'input window, operand 3, single buffered']
    %16 = vsyncpa [#allocation3], 0
    %s17 = scalar_lea.sflag [#allocation3], 1
    %18 = vsyncpa %s17, 0
    %19 = vsyncpa [#allocation5], 0
    %s20 = scalar_lea.sflag [#allocation5], 1
    %21 = vsyncpa %s20, 0
    loop: start=0, step=1, limit=5
    $region2: #{tpu_custom_call.1} parent=1 // loop_pre_header
      _
    $region3: #{tpu_custom_call.1} parent=1 // loop_header
      %s23 = sphi 0, %s27
      %p24 = scmp.ge.s32.totalorder %s23, 5
      %s33 = sphi 0, %s35
      %s36 = sphi 0, %s33
      %s37 = sphi 0, %s36
      %s53 = sphi 0, %s37
      %s59 = sphi 0, %s61
      %s62 = sphi 0, %s59
      %s63 = sphi 0, %s62
      %s79 = sphi 0, %s63
      %s85 = sphi 0, %s87
      %s88 = sphi 0, %s85
      %s89 = sphi 0, %s88
      %s105 = sphi 0, %s89
      %s109 = sphi 0, %s109
      %s111 = sphi 0, %s109
      %s112 = sphi 0, %s111
      %s126 = sphi 0, %s112
      %s130 = sphi 0, %s130
      %s132 = sphi 0, %s130
      %s133 = sphi 0, %s132
      %s147 = sphi 0, %s133
      %s151 = sphi 0, %s151
      %s153 = sphi 0, %s151
      %s154 = sphi 0, %s153
      %s168 = sphi 0, %s154
      %s172 = sphi 0, %s172
      %s174 = sphi 0, %s172
      %s175 = sphi 0, %s174
      %s189 = sphi 0, %s175
      %s193 = sphi 0, %s193
      %s195 = sphi 0, %s193
      %s196 = sphi 0, %s195
      %s210 = sphi 0, %s196
      %s214 = sphi 0, %s214
      %s216 = sphi 0, %s214
      %s217 = sphi 0, %s216
      %s231 = sphi 0, %s217
      %s235 = sphi 0, %s235
      %s237 = sphi 0, %s235
      %s238 = sphi 0, %s237
      %s252 = sphi 0, %s238
      %s256 = sphi 0, %s256
      %s258 = sphi 0, %s256
      %s259 = sphi 0, %s258
      %s273 = sphi 0, %s259
      %s279 = sphi 0, %s281
      %s282 = sphi 0, %s279
      %s283 = sphi 0, %s282
      %s299 = sphi 0, %s283
    $region4: #{tpu_custom_call.1} parent=1 // loop_header_branch
      %26 = sbr.rel (%p24) target = $region8
    $region5: #{tpu_custom_call.1} parent=1 // loop_body
      %s28 = ssub.s32 %s23, 1
      %s29 = ssub.s32 %s23, 2
      %s30 = sadd.s32 %s23, 1
      %s31 = ssub.s32 %s23, %s30
      %p32 = scmp.eq.s32.totalorder %s31, 0
      %s34 = sadd.s32 %s33, 1
      %s35 = scalar_select %p32, %s33, %s34
      %p38 = pneg %p32
      %p39 = scmp.eq.s32.totalorder %s23, 2
      %p40 = por %p38, %p39
      %p41 = scmp.ne.s32.totalorder %s33, %s36
      %p42 = scmp.eq.s32.totalorder %s23, 0
      %p43 = por %p41, %p42
      %p44 = scmp.ne.s32.totalorder %s33, %s36
      %p45 = scmp.eq.s32.totalorder %s28, 2
      %p46 = por %p44, %p45
      %p47 = scmp.ne.s32.totalorder %s36, %s37
      %p48 = scmp.eq.s32.totalorder %s28, 0
      %p49 = por %p47, %p48
      %p50 = scmp.ne.s32.totalorder %s36, %s37
      %p51 = scmp.eq.s32.totalorder %s29, 2
      %p52 = por %p50, %p51
      %p54 = scmp.ne.s32.totalorder %s37, %s53
      %p55 = scmp.eq.s32.totalorder %s29, 0
      %p56 = por %p54, %p55
      %s57 = ssub.s32 %s23, %s30
      %p58 = scmp.eq.s32.totalorder %s57, 0
      %s60 = sadd.s32 %s59, 1
      %s61 = scalar_select %p58, %s59, %s60
      %p64 = pneg %p58
      %p65 = scmp.eq.s32.totalorder %s23, 2
      %p66 = por %p64, %p65
      %p67 = scmp.ne.s32.totalorder %s59, %s62
      %p68 = scmp.eq.s32.totalorder %s23, 0
      %p69 = por %p67, %p68
      %p70 = scmp.ne.s32.totalorder %s59, %s62
      %p71 = scmp.eq.s32.totalorder %s28, 2
      %p72 = por %p70, %p71
      %p73 = scmp.ne.s32.totalorder %s62, %s63
      %p74 = scmp.eq.s32.totalorder %s28, 0
      %p75 = por %p73, %p74
      %p76 = scmp.ne.s32.totalorder %s62, %s63
      %p77 = scmp.eq.s32.totalorder %s29, 2
      %p78 = por %p76, %p77
      %p80 = scmp.ne.s32.totalorder %s63, %s79
      %p81 = scmp.eq.s32.totalorder %s29, 0
      %p82 = por %p80, %p81
      %s83 = ssub.s32 %s23, %s30
      %p84 = scmp.eq.s32.totalorder %s83, 0
      %s86 = sadd.s32 %s85, 1
      %s87 = scalar_select %p84, %s85, %s86
      %p90 = pneg %p84
      %p91 = scmp.eq.s32.totalorder %s23, 2
      %p92 = por %p90, %p91
      %p93 = scmp.ne.s32.totalorder %s85, %s88
      %p94 = scmp.eq.s32.totalorder %s23, 0
      %p95 = por %p93, %p94
      %p96 = scmp.ne.s32.totalorder %s85, %s88
      %p97 = scmp.eq.s32.totalorder %s28, 2
      %p98 = por %p96, %p97
      %p99 = scmp.ne.s32.totalorder %s88, %s89
      %p100 = scmp.eq.s32.totalorder %s28, 0
      %p101 = por %p99, %p100
      %p102 = scmp.ne.s32.totalorder %s88, %s89
      %p103 = scmp.eq.s32.totalorder %s29, 2
      %p104 = por %p102, %p103
      %p106 = scmp.ne.s32.totalorder %s89, %s105
      %p107 = scmp.eq.s32.totalorder %s29, 0
      %p108 = por %p106, %p107
      %s110 = sadd.s32 %s109, 1
      %p113 = scmp.eq.s32.totalorder %s23, 2
      %p114 = scmp.ne.s32.totalorder %s109, %s111
      %p115 = scmp.eq.s32.totalorder %s23, 0
      %p116 = por %p114, %p115
      %p117 = scmp.ne.s32.totalorder %s109, %s111
      %p118 = scmp.eq.s32.totalorder %s28, 2
      %p119 = por %p117, %p118
      %p120 = scmp.ne.s32.totalorder %s111, %s112
      %p121 = scmp.eq.s32.totalorder %s28, 0
      %p122 = por %p120, %p121
      %p123 = scmp.ne.s32.totalorder %s111, %s112
      %p124 = scmp.eq.s32.totalorder %s29, 2
      %p125 = por %p123, %p124
      %p127 = scmp.ne.s32.totalorder %s112, %s126
      %p128 = scmp.eq.s32.totalorder %s29, 0
      %p129 = por %p127, %p128
      %s131 = sadd.s32 %s130, 1
      %p134 = scmp.eq.s32.totalorder %s23, 2
      %p135 = scmp.ne.s32.totalorder %s130, %s132
      %p136 = scmp.eq.s32.totalorder %s23, 0
      %p137 = por %p135, %p136
      %p138 = scmp.ne.s32.totalorder %s130, %s132
      %p139 = scmp.eq.s32.totalorder %s28, 2
      %p140 = por %p138, %p139
      %p141 = scmp.ne.s32.totalorder %s132, %s133
      %p142 = scmp.eq.s32.totalorder %s28, 0
      %p143 = por %p141, %p142
      %p144 = scmp.ne.s32.totalorder %s132, %s133
      %p145 = scmp.eq.s32.totalorder %s29, 2
      %p146 = por %p144, %p145
      %p148 = scmp.ne.s32.totalorder %s133, %s147
      %p149 = scmp.eq.s32.totalorder %s29, 0
      %p150 = por %p148, %p149
      %s152 = sadd.s32 %s151, 1
      %p155 = scmp.eq.s32.totalorder %s23, 2
      %p156 = scmp.ne.s32.totalorder %s151, %s153
      %p157 = scmp.eq.s32.totalorder %s23, 0
      %p158 = por %p156, %p157
      %p159 = scmp.ne.s32.totalorder %s151, %s153
      %p160 = scmp.eq.s32.totalorder %s28, 2
      %p161 = por %p159, %p160
      %p162 = scmp.ne.s32.totalorder %s153, %s154
      %p163 = scmp.eq.s32.totalorder %s28, 0
      %p164 = por %p162, %p163
      %p165 = scmp.ne.s32.totalorder %s153, %s154
      %p166 = scmp.eq.s32.totalorder %s29, 2
      %p167 = por %p165, %p166
      %p169 = scmp.ne.s32.totalorder %s154, %s168
      %p170 = scmp.eq.s32.totalorder %s29, 0
      %p171 = por %p169, %p170
      %s173 = sadd.s32 %s172, 1
      %p176 = scmp.eq.s32.totalorder %s23, 2
      %p177 = scmp.ne.s32.totalorder %s172, %s174
      %p178 = scmp.eq.s32.totalorder %s23, 0
      %p179 = por %p177, %p178
      %p180 = scmp.ne.s32.totalorder %s172, %s174
      %p181 = scmp.eq.s32.totalorder %s28, 2
      %p182 = por %p180, %p181
      %p183 = scmp.ne.s32.totalorder %s174, %s175
      %p184 = scmp.eq.s32.totalorder %s28, 0
      %p185 = por %p183, %p184
      %p186 = scmp.ne.s32.totalorder %s174, %s175
      %p187 = scmp.eq.s32.totalorder %s29, 2
      %p188 = por %p186, %p187
      %p190 = scmp.ne.s32.totalorder %s175, %s189
      %p191 = scmp.eq.s32.totalorder %s29, 0
      %p192 = por %p190, %p191
      %s194 = sadd.s32 %s193, 1
      %p197 = scmp.eq.s32.totalorder %s23, 2
      %p198 = scmp.ne.s32.totalorder %s193, %s195
      %p199 = scmp.eq.s32.totalorder %s23, 0
      %p200 = por %p198, %p199
      %p201 = scmp.ne.s32.totalorder %s193, %s195
      %p202 = scmp.eq.s32.totalorder %s28, 2
      %p203 = por %p201, %p202
      %p204 = scmp.ne.s32.totalorder %s195, %s196
      %p205 = scmp.eq.s32.totalorder %s28, 0
      %p206 = por %p204, %p205
      %p207 = scmp.ne.s32.totalorder %s195, %s196
      %p208 = scmp.eq.s32.totalorder %s29, 2
      %p209 = por %p207, %p208
      %p211 = scmp.ne.s32.totalorder %s196, %s210
      %p212 = scmp.eq.s32.totalorder %s29, 0
      %p213 = por %p211, %p212
      %s215 = sadd.s32 %s214, 1
      %p218 = scmp.eq.s32.totalorder %s23, 2
      %p219 = scmp.ne.s32.totalorder %s214, %s216
      %p220 = scmp.eq.s32.totalorder %s23, 0
      %p221 = por %p219, %p220
      %p222 = scmp.ne.s32.totalorder %s214, %s216
      %p223 = scmp.eq.s32.totalorder %s28, 2
      %p224 = por %p222, %p223
      %p225 = scmp.ne.s32.totalorder %s216, %s217
      %p226 = scmp.eq.s32.totalorder %s28, 0
      %p227 = por %p225, %p226
      %p228 = scmp.ne.s32.totalorder %s216, %s217
      %p229 = scmp.eq.s32.totalorder %s29, 2
      %p230 = por %p228, %p229
      %p232 = scmp.ne.s32.totalorder %s217, %s231
      %p233 = scmp.eq.s32.totalorder %s29, 0
      %p234 = por %p232, %p233
      %s236 = sadd.s32 %s235, 1
      %p239 = scmp.eq.s32.totalorder %s23, 2
      %p240 = scmp.ne.s32.totalorder %s235, %s237
      %p241 = scmp.eq.s32.totalorder %s23, 0
      %p242 = por %p240, %p241
      %p243 = scmp.ne.s32.totalorder %s235, %s237
      %p244 = scmp.eq.s32.totalorder %s28, 2
      %p245 = por %p243, %p244
      %p246 = scmp.ne.s32.totalorder %s237, %s238
      %p247 = scmp.eq.s32.totalorder %s28, 0
      %p248 = por %p246, %p247
      %p249 = scmp.ne.s32.totalorder %s237, %s238
      %p250 = scmp.eq.s32.totalorder %s29, 2
      %p251 = por %p249, %p250
      %p253 = scmp.ne.s32.totalorder %s238, %s252
      %p254 = scmp.eq.s32.totalorder %s29, 0
      %p255 = por %p253, %p254
      %s257 = sadd.s32 %s256, 1
      %p260 = scmp.eq.s32.totalorder %s23, 2
      %p261 = scmp.ne.s32.totalorder %s256, %s258
      %p262 = scmp.eq.s32.totalorder %s23, 0
      %p263 = por %p261, %p262
      %p264 = scmp.ne.s32.totalorder %s256, %s258
      %p265 = scmp.eq.s32.totalorder %s28, 2
      %p266 = por %p264, %p265
      %p267 = scmp.ne.s32.totalorder %s258, %s259
      %p268 = scmp.eq.s32.totalorder %s28, 0
      %p269 = por %p267, %p268
      %p270 = scmp.ne.s32.totalorder %s258, %s259
      %p271 = scmp.eq.s32.totalorder %s29, 2
      %p272 = por %p270, %p271
      %p274 = scmp.ne.s32.totalorder %s259, %s273
      %p275 = scmp.eq.s32.totalorder %s29, 0
      %p276 = por %p274, %p275
      %s277 = ssub.s32 %s23, %s30
      %p278 = scmp.eq.s32.totalorder %s277, 0
      %s280 = sadd.s32 %s279, 1
      %s281 = scalar_select %p278, %s279, %s280
      %p284 = pneg %p278
      %p285 = scmp.eq.s32.totalorder %s23, 2
      %p286 = por %p284, %p285
      %p287 = scmp.ne.s32.totalorder %s279, %s282
      %p288 = scmp.eq.s32.totalorder %s23, 0
      %p289 = por %p287, %p288
      %p290 = scmp.ne.s32.totalorder %s279, %s282
      %p291 = scmp.eq.s32.totalorder %s28, 2
      %p292 = por %p290, %p291
      %p293 = scmp.ne.s32.totalorder %s282, %s283
      %p294 = scmp.eq.s32.totalorder %s28, 0
      %p295 = por %p293, %p294
      %p296 = scmp.ne.s32.totalorder %s282, %s283
      %p297 = scmp.eq.s32.totalorder %s29, 2
      %p298 = por %p296, %p297
      %p300 = scmp.ne.s32.totalorder %s283, %s299
      %p301 = scmp.eq.s32.totalorder %s29, 0
      %p302 = por %p300, %p301
      %p303 = scmp.le.s32.totalorder 1, %s23
      %p304 = scmp.lt.s32.totalorder %s23, 4
      %p305 = pnand %p303, %p304
      %p306 = pneg %p305
      // Predicated region
      $region9: #{tpu_custom_call.1} parent=5 // pred_check
        _
      $region10: #{tpu_custom_call.1} parent=5 // pred_check_branch
        %308 = sbr.rel (%p305) target = $region12
      $region11: #{tpu_custom_call.1} parent=5 // pred_region
        %s309 = ssub.s32 %s23, 1
        // Predicated region
        $region13: #{tpu_custom_call.1} parent=11 // pred_check
          %p310 = pneg %p122
        $region14: #{tpu_custom_call.1} parent=11 // pred_check_branch
          %312 = sbr.rel (%p310) target = $region16
        $region15: #{tpu_custom_call.1} parent=11 // pred_region
          %s314 = ssub.s32 32, 32
          %315 = vsyncadd [#allocation5], %s314
          %s317 = sshll.u32 [#allocation6], 4
          %s318 = int_to_ptr.vmem [resolvable:$true] %s317
          %320 = dma.hbm_to_vmem [thread:$0]  %s3, 32, %s318, [#allocation5]
        $region16: #{tpu_custom_call.1} parent=11 // pred_fallthru
          _
        // Predicated region
        $region17: #{tpu_custom_call.1} parent=11 // pred_check
          %p321 = pneg %p143
        $region18: #{tpu_custom_call.1} parent=11 // pred_check_branch
          %323 = sbr.rel (%p321) target = $region20
        $region19: #{tpu_custom_call.1} parent=11 // pred_region
          _
        $region20: #{tpu_custom_call.1} parent=11 // pred_fallthru
          _
        // Predicated region
        $region21: #{tpu_custom_call.1} parent=11 // pred_check
          %p324 = pneg %p164
        $region22: #{tpu_custom_call.1} parent=11 // pred_check_branch
          %326 = sbr.rel (%p324) target = $region24
        $region23: #{tpu_custom_call.1} parent=11 // pred_region
          _
        $region24: #{tpu_custom_call.1} parent=11 // pred_fallthru
          _
        // Predicated region
        $region25: #{tpu_custom_call.1} parent=11 // pred_check
          %p327 = pneg %p185
        $region26: #{tpu_custom_call.1} parent=11 // pred_check_branch
          %329 = sbr.rel (%p327) target = $region28
        $region27: #{tpu_custom_call.1} parent=11 // pred_region
          _
        $region28: #{tpu_custom_call.1} parent=11 // pred_fallthru
          _
        // Predicated region
        $region29: #{tpu_custom_call.1} parent=11 // pred_check
          %p330 = pneg %p206
        $region30: #{tpu_custom_call.1} parent=11 // pred_check_branch
          %332 = sbr.rel (%p330) target = $region32
        $region31: #{tpu_custom_call.1} parent=11 // pred_region
          _
        $region32: #{tpu_custom_call.1} parent=11 // pred_fallthru
          _
        // Predicated region
        $region33: #{tpu_custom_call.1} parent=11 // pred_check
          %p333 = pneg %p227
        $region34: #{tpu_custom_call.1} parent=11 // pred_check_branch
          %335 = sbr.rel (%p333) target = $region36
        $region35: #{tpu_custom_call.1} parent=11 // pred_region
          _
        $region36: #{tpu_custom_call.1} parent=11 // pred_fallthru
          _
        // Predicated region
        $region37: #{tpu_custom_call.1} parent=11 // pred_check
          %p336 = pneg %p248
        $region38: #{tpu_custom_call.1} parent=11 // pred_check_branch
          %338 = sbr.rel (%p336) target = $region40
        $region39: #{tpu_custom_call.1} parent=11 // pred_region
          _
        $region40: #{tpu_custom_call.1} parent=11 // pred_fallthru
          _
        // Predicated region
        $region41: #{tpu_custom_call.1} parent=11 // pred_check
          %p339 = pneg %p269
        $region42: #{tpu_custom_call.1} parent=11 // pred_check_branch
          %341 = sbr.rel (%p339) target = $region44
        $region43: #{tpu_custom_call.1} parent=11 // pred_region
          _
        $region44: #{tpu_custom_call.1} parent=11 // pred_fallthru
          _
      $region12: #{tpu_custom_call.1} parent=5 // pred_fallthru
        _
      %p342 = scmp.lt.s32.totalorder %s23, 3
      // Predicated region
      $region45: #{tpu_custom_call.1} parent=5 // pred_check
        %p343 = pneg %p342
      $region46: #{tpu_custom_call.1} parent=5 // pred_check_branch
        %345 = sbr.rel (%p343) target = $region48
      $region47: #{tpu_custom_call.1} parent=5 // pred_region
        // Predicated region
        $region49: #{tpu_custom_call.1} parent=47 // pred_check
          %p346 = pneg %p43
        $region50: #{tpu_custom_call.1} parent=47 // pred_check_branch
          %348 = sbr.rel (%p346) target = $region52
        $region51: #{tpu_custom_call.1} parent=47 // pred_region
          %p349 = scmp.lt.s32.totalorder %s23, 2
          %s350 = scalar_select %p349, %s23, 2
          %s351 = smul.addr %s350, 12
          %s352 = smul.addr %s351, 4
          %s353 = scalar_lea.vmem %s0, %s352
        $region52: #{tpu_custom_call.1} parent=47 // pred_fallthru
          _
        // Predicated region
        $region53: #{tpu_custom_call.1} parent=47 // pred_check
          %p354 = pneg %p69
        $region54: #{tpu_custom_call.1} parent=47 // pred_check_branch
          %356 = sbr.rel (%p354) target = $region56
        $region55: #{tpu_custom_call.1} parent=47 // pred_region
          %s357 = sand.u32 %s59, 1
          %s358 = scalar_lea.sflag [#allocation3], %s357
          %s359 = sand.u32 %s59, 1
          %s360 = smul.addr %s359, 2
          %s361 = scalar_lea.vmem [#allocation2], %s360
          %s363 = ssub.s32 32, 32
          %364 = vsyncadd %s358, %s363
          %s365 = smul.addr %s23, 2
          %s366 = smul.addr %s365, 16
          %s367 = scalar_lea.hbm %s1, %s366
          %s369 = sshll.u32 %s361, 4
          %s370 = int_to_ptr.vmem [resolvable:$true] %s369
          %372 = dma.hbm_to_vmem [thread:$0]  %s367, 32, %s370, %s358
        $region56: #{tpu_custom_call.1} parent=47 // pred_fallthru
          _
        // Predicated region
        $region57: #{tpu_custom_call.1} parent=47 // pred_check
          %p373 = pneg %p95
        $region58: #{tpu_custom_call.1} parent=47 // pred_check_branch
          %375 = sbr.rel (%p373) target = $region60
        $region59: #{tpu_custom_call.1} parent=47 // pred_region
          %s376 = sand.u32 %s23, 1
          %s377 = scalar_lea.sflag [#allocation5], %s376
          %s378 = sand.u32 %s85, 1
          %s379 = scalar_lea.vmem [#allocation4], %s378
          %s381 = ssub.s32 16, 16
          %382 = vsyncadd %s377, %s381
          %s383 = smul.addr %s23, 16
          %s384 = scalar_lea.hbm %s2, %s383
          %s386 = sshll.u32 %s379, 4
          %s387 = int_to_ptr.vmem [resolvable:$true] %s386
          %389 = dma.hbm_to_vmem [thread:$0]  %s384, 16, %s387, %s377
        $region60: #{tpu_custom_call.1} parent=47 // pred_fallthru
          _
      $region48: #{tpu_custom_call.1} parent=5 // pred_fallthru
        _
      %p390 = scmp.le.s32.totalorder 1, %s23
      %p391 = scmp.lt.s32.totalorder %s23, 4
      %p392 = pnand %p390, %p391
      %p393 = pneg %p392
      // Predicated region
      $region61: #{tpu_custom_call.1} parent=5 // pred_check
        _
      $region62: #{tpu_custom_call.1} parent=5 // pred_check_branch
        %395 = sbr.rel (%p392) target = $region64
      $region63: #{tpu_custom_call.1} parent=5 // pred_region
        %s396 = ssub.s32 %s23, 1
        %s397 = sand.u32 %s62, 1
        %s398 = scalar_lea.sflag [#allocation3], %s397
        %s399 = sand.u32 %s62, 1
        %s400 = smul.addr %s399, 2
        %s401 = scalar_lea.vmem [#allocation2], %s400
        // Predicated region
        $region65: #{tpu_custom_call.1} parent=63 // pred_check
          %p402 = pneg %p75
        $region66: #{tpu_custom_call.1} parent=63 // pred_check_branch
          %404 = sbr.rel (%p402) target = $region68
        $region67: #{tpu_custom_call.1} parent=63 // pred_region
          %405 = dma.done %s398, 32
        $region68: #{tpu_custom_call.1} parent=63 // pred_fallthru
          _
        %s406 = sand.u32 %s28, 1
        %s407 = scalar_lea.sflag [#allocation5], %s406
        %s408 = sand.u32 %s88, 1
        %s409 = scalar_lea.vmem [#allocation4], %s408
        // Predicated region
        $region69: #{tpu_custom_call.1} parent=63 // pred_check
          %p410 = pneg %p101
        $region70: #{tpu_custom_call.1} parent=63 // pred_check_branch
          %412 = sbr.rel (%p410) target = $region72
        $region71: #{tpu_custom_call.1} parent=63 // pred_region
          %413 = dma.done %s407, 16
        $region72: #{tpu_custom_call.1} parent=63 // pred_fallthru
          _
        // Predicated region
        $region73: #{tpu_custom_call.1} parent=63 // pred_check
          %p414 = pneg %p122
        $region74: #{tpu_custom_call.1} parent=63 // pred_check_branch
          %416 = sbr.rel (%p414) target = $region76
        $region75: #{tpu_custom_call.1} parent=63 // pred_region
          %417 = dma.done [#allocation5], 32
        $region76: #{tpu_custom_call.1} parent=63 // pred_fallthru
          _
        %p418 = scmp.lt.s32.totalorder %s28, 2
        %s419 = scalar_select %p418, %s28, 2
        %s420 = smul.addr %s419, 12
        %s421 = smul.addr %s420, 4
        %s422 = scalar_lea.vmem %s0, %s421
        %p423 = pneg %p49
        %p424 = pneg %p46
        %s425 = sand.u32 %s62, 1
        %s426 = scalar_lea.sflag [#allocation3], %s425
        %s427 = sand.u32 %s62, 1
        %s428 = smul.addr %s427, 2
        %s429 = scalar_lea.vmem [#allocation2], %s428
        %p430 = pneg %p75
        %p431 = pneg %p72
        %s432 = sand.u32 %s28, 1
        %s433 = scalar_lea.sflag [#allocation5], %s432
        %s434 = sand.u32 %s88, 1
        %s435 = scalar_lea.vmem [#allocation4], %s434
        %p436 = pneg %p101
        %p437 = pneg %p98
        %p438 = pneg %p122
        %p439 = pneg %p119
        %p440 = pneg %p143
        %p441 = pneg %p140
        %p442 = pneg %p164
        %p443 = pneg %p161
        %p444 = pneg %p185
        %p445 = pneg %p182
        %p446 = pneg %p206
        %p447 = pneg %p203
        %p448 = pneg %p227
        %p449 = pneg %p224
        %p450 = pneg %p248
        %p451 = pneg %p245
        %p452 = pneg %p269
        %p453 = pneg %p266
        %p454 = pneg %p295
        %p455 = pneg %p292
        %p456 = scmp.lt.s32.totalorder %s28, 2
        %s457 = scalar_select %p456, %s28, 2
        %s458 = smul.addr %s457, 6
        %s459 = smul.addr %s458, 8
        %s460 = scalar_lea.vmem %s11, %s459
        %p461 = scmp.lt.s32.totalorder %s28, 2
        %s462 = scalar_select %p461, %s28, 2
        %s463 = smul.addr %s462, 12
        %s464 = smul.addr %s463, 4
        %s465 = scalar_lea.vmem %s0, %s464
        %p466 = scmp.lt.s32.totalorder %s28, 2
        %s467 = scalar_select %p466, %s28, 2
        %s468 = smul.addr %s467, 6
        %s469 = smul.addr %s468, 8
        %s470 = scalar_lea.vmem %s11, %s469
        %v472 = vld [vmem:[%s465] sm:$0xff]
        %v473 = vld [vmem:[%s465 + $0x8] sm:$0xff]
        %v474 = vld [vmem:[%s465 + $0x10] sm:$0xff]
        %v475 = vld [vmem:[%s465 + $0x18] sm:$0xff]
        %v476 = vld [vmem:[%s465 + $0x20] sm:$0xff]
        %v477 = vld [vmem:[%s465 + $0x28] sm:$0xff]
        %v478 = vld [vmem:[%s401] sm:$0x3]
        %v479 = vld [vmem:[%s409] sm:$0x1]
        %v480 = vld [vmem:[#allocation6] sm:$0x3]
        %v481 = vld [vmem:[%s4] sm:$0xf]
        %v482 = vld [vmem:[%s4 + $0x4] sm:$0xf]
        %v483 = vld [vmem:[%s4 + $0x8] sm:$0xf]
        %v484 = vld [vmem:[%s4 + $0xc] sm:$0xf]
        %v485 = vld [vmem:[%s4 + $0x10] sm:$0xf]
        %v486 = vld [vmem:[%s4 + $0x14] sm:$0xf]
        %v487 = vld [vmem:[%s4 + $0x18] sm:$0xf]
        %v488 = vld [vmem:[%s4 + $0x1c] sm:$0xf]
        %v489 = vld [vmem:[%s4 + $0x20] sm:$0xf]
        %v490 = vld [vmem:[%s4 + $0x24] sm:$0xf]
        %v491 = vld [vmem:[%s4 + $0x28] sm:$0xf]
        %v492 = vld [vmem:[%s4 + $0x2c] sm:$0xf]
        %v493 = vld [vmem:[%s4 + $0x30] sm:$0xf]
        %v494 = vld [vmem:[%s4 + $0x34] sm:$0xf]
        %v495 = vld [vmem:[%s4 + $0x38] sm:$0xf]
        %v496 = vld [vmem:[%s4 + $0x3c] sm:$0xf]
        %v497 = vld [vmem:[%s4 + $0x40] sm:$0xf]
        %v498 = vld [vmem:[%s4 + $0x44] sm:$0xf]
        %v499 = vld [vmem:[%s4 + $0x48] sm:$0xf]
        %v500 = vld [vmem:[%s4 + $0x4c] sm:$0xf]
        %v501 = vld [vmem:[%s4 + $0x50] sm:$0xf]
        %v502 = vld [vmem:[%s4 + $0x54] sm:$0xf]
        %v503 = vld [vmem:[%s4 + $0x58] sm:$0xf]
        %v504 = vld [vmem:[%s4 + $0x5c] sm:$0xf]
        %v505 = vld [vmem:[%s4 + $0x60] sm:$0xf]
        %v506 = vld [vmem:[%s4 + $0x64] sm:$0xf]
        %v507 = vld [vmem:[%s4 + $0x68] sm:$0xf]
        %v508 = vld [vmem:[%s4 + $0x6c] sm:$0xf]
        %v509 = vld [vmem:[%s4 + $0x70] sm:$0xf]
        %v510 = vld [vmem:[%s4 + $0x74] sm:$0xf]
        %v511 = vld [vmem:[%s4 + $0x78] sm:$0xf]
        %v512 = vld [vmem:[%s4 + $0x7c] sm:$0xf]
        %v513 = vunpack.c.l.bf16 %v472
        %v514 = vunpack.c.h.bf16 %v472
        %v515 = vunpack.c.l.bf16 %v473
        %v516 = vunpack.c.h.bf16 %v473
        %v517 = vunpack.c.l.bf16 %v474
        %v518 = vunpack.c.h.bf16 %v474
        %v519 = vunpack.c.l.bf16 %v475
        %v520 = vunpack.c.h.bf16 %v475
        %v521 = vunpack.c.l.bf16 %v476
        %v522 = vunpack.c.h.bf16 %v476
        %v523 = vunpack.c.l.bf16 %v477
        %v524 = vunpack.c.h.bf16 %v477
        %525 = vrot.lane.b32.xlu0 %v513, 127
        %v526 = vpop.permute.xlu0 %525
        %527 = vrot.lane.b32.xlu0 %v515, 127
        %v528 = vpop.permute.xlu0 %527
        %529 = vrot.lane.b32.xlu0 %v517, 127
        %v530 = vpop.permute.xlu0 %529
        %531 = vrot.lane.b32.xlu0 %v519, 127
        %v532 = vpop.permute.xlu0 %531
        %533 = vrot.lane.b32.xlu0 %v521, 127
        %v534 = vpop.permute.xlu0 %533
        %535 = vrot.lane.b32.xlu0 %v523, 127
        %v536 = vpop.permute.xlu0 %535
        %537 = vrot.lane.b32.xlu0 %v514, 127
        %v538 = vpop.permute.xlu0 %537
        %539 = vrot.lane.b32.xlu0 %v516, 127
        %v540 = vpop.permute.xlu0 %539
        %541 = vrot.lane.b32.xlu0 %v518, 127
        %v542 = vpop.permute.xlu0 %541
        %543 = vrot.lane.b32.xlu0 %v520, 127
        %v544 = vpop.permute.xlu0 %543
        %545 = vrot.lane.b32.xlu0 %v522, 127
        %v546 = vpop.permute.xlu0 %545
        %547 = vrot.lane.b32.xlu0 %v524, 127
        %v548 = vpop.permute.xlu0 %547
        %v549 = vlaneseq
        %v550 = vand.u32 %v549, 127
        %vm551 = vcmp.lt.s32.totalorder %v550, 127
        %v552 = vsel %vm551, %v526, %v538
        %v553 = vsel %vm551, %v528, %v540
        %v554 = vsel %vm551, %v530, %v542
        %v555 = vsel %vm551, %v532, %v544
        %v556 = vsel %vm551, %v534, %v546
        %v557 = vsel %vm551, %v536, %v548
        %v558 = vsel %vm551, %v538, %v526
        %v559 = vsel %vm551, %v540, %v528
        %v560 = vsel %vm551, %v542, %v530
        %v561 = vsel %vm551, %v544, %v532
        %v562 = vsel %vm551, %v546, %v534
        %v563 = vsel %vm551, %v548, %v536
        %v564 = vpack.c.bf16 %v553, %v552
        %v565 = vpack.c.bf16 %v559, %v558
        %v566 = vpack.c.bf16 %v555, %v554
        %v567 = vpack.c.bf16 %v561, %v560
        %v568 = vpack.c.bf16 %v557, %v556
        %v569 = vpack.c.bf16 %v563, %v562
        %570 = vrot.lane.b32.xlu0 %v513, 126
        %v571 = vpop.permute.xlu0 %570
        %572 = vrot.lane.b32.xlu0 %v515, 126
        %v573 = vpop.permute.xlu0 %572
        %574 = vrot.lane.b32.xlu0 %v517, 126
        %v575 = vpop.permute.xlu0 %574
        %576 = vrot.lane.b32.xlu0 %v519, 126
        %v577 = vpop.permute.xlu0 %576
        %578 = vrot.lane.b32.xlu0 %v521, 126
        %v579 = vpop.permute.xlu0 %578
        %580 = vrot.lane.b32.xlu0 %v523, 126
        %v581 = vpop.permute.xlu0 %580
        %582 = vrot.lane.b32.xlu0 %v514, 126
        %v583 = vpop.permute.xlu0 %582
        %584 = vrot.lane.b32.xlu0 %v516, 126
        %v585 = vpop.permute.xlu0 %584
        %586 = vrot.lane.b32.xlu0 %v518, 126
        %v587 = vpop.permute.xlu0 %586
        %588 = vrot.lane.b32.xlu0 %v520, 126
        %v589 = vpop.permute.xlu0 %588
        %590 = vrot.lane.b32.xlu0 %v522, 126
        %v591 = vpop.permute.xlu0 %590
        %592 = vrot.lane.b32.xlu0 %v524, 126
        %v593 = vpop.permute.xlu0 %592
        %vm594 = vcmp.lt.s32.totalorder %v550, 126
        %v595 = vsel %vm594, %v571, %v583
        %v596 = vsel %vm594, %v573, %v585
        %v597 = vsel %vm594, %v575, %v587
        %v598 = vsel %vm594, %v577, %v589
        %v599 = vsel %vm594, %v579, %v591
        %v600 = vsel %vm594, %v581, %v593
        %v601 = vsel %vm594, %v583, %v571
        %v602 = vsel %vm594, %v585, %v573
        %v603 = vsel %vm594, %v587, %v575
        %v604 = vsel %vm594, %v589, %v577
        %v605 = vsel %vm594, %v591, %v579
        %v606 = vsel %vm594, %v593, %v581
        %v607 = vpack.c.bf16 %v596, %v595
        %v608 = vpack.c.bf16 %v602, %v601
        %v609 = vpack.c.bf16 %v598, %v597
        %v610 = vpack.c.bf16 %v604, %v603
        %v611 = vpack.c.bf16 %v600, %v599
        %v612 = vpack.c.bf16 %v606, %v605
        %613 = vrot.lane.b32.xlu0 %v513, 125
        %v614 = vpop.permute.xlu0 %613
        %615 = vrot.lane.b32.xlu0 %v515, 125
        %v616 = vpop.permute.xlu0 %615
        %617 = vrot.lane.b32.xlu0 %v517, 125
        %v618 = vpop.permute.xlu0 %617
        %619 = vrot.lane.b32.xlu0 %v519, 125
        %v620 = vpop.permute.xlu0 %619
        %621 = vrot.lane.b32.xlu0 %v521, 125
        %v622 = vpop.permute.xlu0 %621
        %623 = vrot.lane.b32.xlu0 %v523, 125
        %v624 = vpop.permute.xlu0 %623
        %625 = vrot.lane.b32.xlu0 %v514, 125
        %v626 = vpop.permute.xlu0 %625
        %627 = vrot.lane.b32.xlu0 %v516, 125
        %v628 = vpop.permute.xlu0 %627
        %629 = vrot.lane.b32.xlu0 %v518, 125
        %v630 = vpop.permute.xlu0 %629
        %631 = vrot.lane.b32.xlu0 %v520, 125
        %v632 = vpop.permute.xlu0 %631
        %633 = vrot.lane.b32.xlu0 %v522, 125
        %v634 = vpop.permute.xlu0 %633
        %635 = vrot.lane.b32.xlu0 %v524, 125
        %v636 = vpop.permute.xlu0 %635
        %vm637 = vcmp.lt.s32.totalorder %v550, 125
        %v638 = vsel %vm637, %v614, %v626
        %v639 = vsel %vm637, %v616, %v628
        %v640 = vsel %vm637, %v618, %v630
        %v641 = vsel %vm637, %v620, %v632
        %v642 = vsel %vm637, %v622, %v634
        %v643 = vsel %vm637, %v624, %v636
        %v644 = vsel %vm637, %v626, %v614
        %v645 = vsel %vm637, %v628, %v616
        %v646 = vsel %vm637, %v630, %v618
        %v647 = vsel %vm637, %v632, %v620
        %v648 = vsel %vm637, %v634, %v622
        %v649 = vsel %vm637, %v636, %v624
        %v650 = vpack.c.bf16 %v639, %v638
        %v651 = vpack.c.bf16 %v645, %v644
        %v652 = vpack.c.bf16 %v641, %v640
        %v653 = vpack.c.bf16 %v647, %v646
        %v654 = vpack.c.bf16 %v643, %v642
        %v655 = vpack.c.bf16 %v649, %v648
        %656 = vrot.lane.b32.xlu0 %v513, 124
        %v657 = vpop.permute.xlu0 %656
        %658 = vrot.lane.b32.xlu0 %v515, 124
        %v659 = vpop.permute.xlu0 %658
        %660 = vrot.lane.b32.xlu0 %v517, 124
        %v661 = vpop.permute.xlu0 %660
        %662 = vrot.lane.b32.xlu0 %v519, 124
        %v663 = vpop.permute.xlu0 %662
        %664 = vrot.lane.b32.xlu0 %v521, 124
        %v665 = vpop.permute.xlu0 %664
        %666 = vrot.lane.b32.xlu0 %v523, 124
        %v667 = vpop.permute.xlu0 %666
        %668 = vrot.lane.b32.xlu0 %v514, 124
        %v669 = vpop.permute.xlu0 %668
        %670 = vrot.lane.b32.xlu0 %v516, 124
        %v671 = vpop.permute.xlu0 %670
        %672 = vrot.lane.b32.xlu0 %v518, 124
        %v673 = vpop.permute.xlu0 %672
        %674 = vrot.lane.b32.xlu0 %v520, 124
        %v675 = vpop.permute.xlu0 %674
        %676 = vrot.lane.b32.xlu0 %v522, 124
        %v677 = vpop.permute.xlu0 %676
        %678 = vrot.lane.b32.xlu0 %v524, 124
        %v679 = vpop.permute.xlu0 %678
        %vm680 = vcmp.lt.s32.totalorder %v550, 124
        %v681 = vsel %vm680, %v657, %v669
        %v682 = vsel %vm680, %v659, %v671
        %v683 = vsel %vm680, %v661, %v673
        %v684 = vsel %vm680, %v663, %v675
        %v685 = vsel %vm680, %v665, %v677
        %v686 = vsel %vm680, %v667, %v679
        %v687 = vsel %vm680, %v669, %v657
        %v688 = vsel %vm680, %v671, %v659
        %v689 = vsel %vm680, %v673, %v661
        %v690 = vsel %vm680, %v675, %v663
        %v691 = vsel %vm680, %v677, %v665
        %v692 = vsel %vm680, %v679, %v667
        %v693 = vpack.c.bf16 %v682, %v681
        %v694 = vpack.c.bf16 %v688, %v687
        %v695 = vpack.c.bf16 %v684, %v683
        %v696 = vpack.c.bf16 %v690, %v689
        %v697 = vpack.c.bf16 %v686, %v685
        %v698 = vpack.c.bf16 %v692, %v691
        %699 = vrot.lane.b32.xlu0 %v513, 123
        %v700 = vpop.permute.xlu0 %699
        %701 = vrot.lane.b32.xlu0 %v515, 123
        %v702 = vpop.permute.xlu0 %701
        %703 = vrot.lane.b32.xlu0 %v517, 123
        %v704 = vpop.permute.xlu0 %703
        %705 = vrot.lane.b32.xlu0 %v519, 123
        %v706 = vpop.permute.xlu0 %705
        %707 = vrot.lane.b32.xlu0 %v521, 123
        %v708 = vpop.permute.xlu0 %707
        %709 = vrot.lane.b32.xlu0 %v523, 123
        %v710 = vpop.permute.xlu0 %709
        %711 = vrot.lane.b32.xlu0 %v514, 123
        %v712 = vpop.permute.xlu0 %711
        %713 = vrot.lane.b32.xlu0 %v516, 123
        %v714 = vpop.permute.xlu0 %713
        %715 = vrot.lane.b32.xlu0 %v518, 123
        %v716 = vpop.permute.xlu0 %715
        %717 = vrot.lane.b32.xlu0 %v520, 123
        %v718 = vpop.permute.xlu0 %717
        %719 = vrot.lane.b32.xlu0 %v522, 123
        %v720 = vpop.permute.xlu0 %719
        %721 = vrot.lane.b32.xlu0 %v524, 123
        %v722 = vpop.permute.xlu0 %721
        %vm723 = vcmp.lt.s32.totalorder %v550, 123
        %v724 = vsel %vm723, %v700, %v712
        %v725 = vsel %vm723, %v702, %v714
        %v726 = vsel %vm723, %v704, %v716
        %v727 = vsel %vm723, %v706, %v718
        %v728 = vsel %vm723, %v708, %v720
        %v729 = vsel %vm723, %v710, %v722
        %v730 = vsel %vm723, %v712, %v700
        %v731 = vsel %vm723, %v714, %v702
        %v732 = vsel %vm723, %v716, %v704
        %v733 = vsel %vm723, %v718, %v706
        %v734 = vsel %vm723, %v720, %v708
        %v735 = vsel %vm723, %v722, %v710
        %v736 = vpack.c.bf16 %v725, %v724
        %v737 = vpack.c.bf16 %v731, %v730
        %v738 = vpack.c.bf16 %v727, %v726
        %v739 = vpack.c.bf16 %v733, %v732
        %v740 = vpack.c.bf16 %v729, %v728
        %v741 = vpack.c.bf16 %v735, %v734
        %742 = vrot.lane.b32.xlu0 %v513, 122
        %v743 = vpop.permute.xlu0 %742
        %744 = vrot.lane.b32.xlu0 %v515, 122
        %v745 = vpop.permute.xlu0 %744
        %746 = vrot.lane.b32.xlu0 %v517, 122
        %v747 = vpop.permute.xlu0 %746
        %748 = vrot.lane.b32.xlu0 %v519, 122
        %v749 = vpop.permute.xlu0 %748
        %750 = vrot.lane.b32.xlu0 %v521, 122
        %v751 = vpop.permute.xlu0 %750
        %752 = vrot.lane.b32.xlu0 %v523, 122
        %v753 = vpop.permute.xlu0 %752
        %754 = vrot.lane.b32.xlu0 %v514, 122
        %v755 = vpop.permute.xlu0 %754
        %756 = vrot.lane.b32.xlu0 %v516, 122
        %v757 = vpop.permute.xlu0 %756
        %758 = vrot.lane.b32.xlu0 %v518, 122
        %v759 = vpop.permute.xlu0 %758
        %760 = vrot.lane.b32.xlu0 %v520, 122
        %v761 = vpop.permute.xlu0 %760
        %762 = vrot.lane.b32.xlu0 %v522, 122
        %v763 = vpop.permute.xlu0 %762
        %764 = vrot.lane.b32.xlu0 %v524, 122
        %v765 = vpop.permute.xlu0 %764
        %vm766 = vcmp.lt.s32.totalorder %v550, 122
        %v767 = vsel %vm766, %v743, %v755
        %v768 = vsel %vm766, %v745, %v757
        %v769 = vsel %vm766, %v747, %v759
        %v770 = vsel %vm766, %v749, %v761
        %v771 = vsel %vm766, %v751, %v763
        %v772 = vsel %vm766, %v753, %v765
        %v773 = vsel %vm766, %v755, %v743
        %v774 = vsel %vm766, %v757, %v745
        %v775 = vsel %vm766, %v759, %v747
        %v776 = vsel %vm766, %v761, %v749
        %v777 = vsel %vm766, %v763, %v751
        %v778 = vsel %vm766, %v765, %v753
        %v779 = vpack.c.bf16 %v768, %v767
        %v780 = vpack.c.bf16 %v774, %v773
        %v781 = vpack.c.bf16 %v770, %v769
        %v782 = vpack.c.bf16 %v776, %v775
        %v783 = vpack.c.bf16 %v772, %v771
        %v784 = vpack.c.bf16 %v778, %v777
        %785 = vrot.lane.b32.xlu0 %v513, 121
        %v786 = vpop.permute.xlu0 %785
        %787 = vrot.lane.b32.xlu0 %v515, 121
        %v788 = vpop.permute.xlu0 %787
        %789 = vrot.lane.b32.xlu0 %v517, 121
        %v790 = vpop.permute.xlu0 %789
        %791 = vrot.lane.b32.xlu0 %v519, 121
        %v792 = vpop.permute.xlu0 %791
        %793 = vrot.lane.b32.xlu0 %v521, 121
        %v794 = vpop.permute.xlu0 %793
        %795 = vrot.lane.b32.xlu0 %v523, 121
        %v796 = vpop.permute.xlu0 %795
        %797 = vrot.lane.b32.xlu0 %v514, 121
        %v798 = vpop.permute.xlu0 %797
        %799 = vrot.lane.b32.xlu0 %v516, 121
        %v800 = vpop.permute.xlu0 %799
        %801 = vrot.lane.b32.xlu0 %v518, 121
        %v802 = vpop.permute.xlu0 %801
        %803 = vrot.lane.b32.xlu0 %v520, 121
        %v804 = vpop.permute.xlu0 %803
        %805 = vrot.lane.b32.xlu0 %v522, 121
        %v806 = vpop.permute.xlu0 %805
        %807 = vrot.lane.b32.xlu0 %v524, 121
        %v808 = vpop.permute.xlu0 %807
        %vm809 = vcmp.lt.s32.totalorder %v550, 121
        %v810 = vsel %vm809, %v786, %v798
        %v811 = vsel %vm809, %v788, %v800
        %v812 = vsel %vm809, %v790, %v802
        %v813 = vsel %vm809, %v792, %v804
        %v814 = vsel %vm809, %v794, %v806
        %v815 = vsel %vm809, %v796, %v808
        %v816 = vsel %vm809, %v798, %v786
        %v817 = vsel %vm809, %v800, %v788
        %v818 = vsel %vm809, %v802, %v790
        %v819 = vsel %vm809, %v804, %v792
        %v820 = vsel %vm809, %v806, %v794
        %v821 = vsel %vm809, %v808, %v796
        %v822 = vpack.c.bf16 %v811, %v810
        %v823 = vpack.c.bf16 %v817, %v816
        %v824 = vpack.c.bf16 %v813, %v812
        %v825 = vpack.c.bf16 %v819, %v818
        %v826 = vpack.c.bf16 %v815, %v814
        %v827 = vpack.c.bf16 %v821, %v820
        %828 = vrot.lane.b32.xlu0 %v513, 120
        %v829 = vpop.permute.xlu0 %828
        %830 = vrot.lane.b32.xlu0 %v515, 120
        %v831 = vpop.permute.xlu0 %830
        %832 = vrot.lane.b32.xlu0 %v517, 120
        %v833 = vpop.permute.xlu0 %832
        %834 = vrot.lane.b32.xlu0 %v519, 120
        %v835 = vpop.permute.xlu0 %834
        %836 = vrot.lane.b32.xlu0 %v521, 120
        %v837 = vpop.permute.xlu0 %836
        %838 = vrot.lane.b32.xlu0 %v523, 120
        %v839 = vpop.permute.xlu0 %838
        %840 = vrot.lane.b32.xlu0 %v514, 120
        %v841 = vpop.permute.xlu0 %840
        %842 = vrot.lane.b32.xlu0 %v516, 120
        %v843 = vpop.permute.xlu0 %842
        %844 = vrot.lane.b32.xlu0 %v518, 120
        %v845 = vpop.permute.xlu0 %844
        %846 = vrot.lane.b32.xlu0 %v520, 120
        %v847 = vpop.permute.xlu0 %846
        %848 = vrot.lane.b32.xlu0 %v522, 120
        %v849 = vpop.permute.xlu0 %848
        %850 = vrot.lane.b32.xlu0 %v524, 120
        %v851 = vpop.permute.xlu0 %850
        %vm852 = vcmp.lt.s32.totalorder %v550, 120
        %v853 = vsel %vm852, %v829, %v841
        %v854 = vsel %vm852, %v831, %v843
        %v855 = vsel %vm852, %v833, %v845
        %v856 = vsel %vm852, %v835, %v847
        %v857 = vsel %vm852, %v837, %v849
        %v858 = vsel %vm852, %v839, %v851
        %v859 = vsel %vm852, %v841, %v829
        %v860 = vsel %vm852, %v843, %v831
        %v861 = vsel %vm852, %v845, %v833
        %v862 = vsel %vm852, %v847, %v835
        %v863 = vsel %vm852, %v849, %v837
        %v864 = vsel %vm852, %v851, %v839
        %v865 = vpack.c.bf16 %v854, %v853
        %v866 = vpack.c.bf16 %v860, %v859
        %v867 = vpack.c.bf16 %v856, %v855
        %v868 = vpack.c.bf16 %v862, %v861
        %v869 = vpack.c.bf16 %v858, %v857
        %v870 = vpack.c.bf16 %v864, %v863
        %871 = vrot.lane.b32.xlu0 %v513, 119
        %v872 = vpop.permute.xlu0 %871
        %873 = vrot.lane.b32.xlu0 %v515, 119
        %v874 = vpop.permute.xlu0 %873
        %875 = vrot.lane.b32.xlu0 %v517, 119
        %v876 = vpop.permute.xlu0 %875
        %877 = vrot.lane.b32.xlu0 %v519, 119
        %v878 = vpop.permute.xlu0 %877
        %879 = vrot.lane.b32.xlu0 %v521, 119
        %v880 = vpop.permute.xlu0 %879
        %881 = vrot.lane.b32.xlu0 %v523, 119
        %v882 = vpop.permute.xlu0 %881
        %883 = vrot.lane.b32.xlu0 %v514, 119
        %v884 = vpop.permute.xlu0 %883
        %885 = vrot.lane.b32.xlu0 %v516, 119
        %v886 = vpop.permute.xlu0 %885
        %887 = vrot.lane.b32.xlu0 %v518, 119
        %v888 = vpop.permute.xlu0 %887
        %889 = vrot.lane.b32.xlu0 %v520, 119
        %v890 = vpop.permute.xlu0 %889
        %891 = vrot.lane.b32.xlu0 %v522, 119
        %v892 = vpop.permute.xlu0 %891
        %893 = vrot.lane.b32.xlu0 %v524, 119
        %v894 = vpop.permute.xlu0 %893
        %vm895 = vcmp.lt.s32.totalorder %v550, 119
        %v896 = vsel %vm895, %v872, %v884
        %v897 = vsel %vm895, %v874, %v886
        %v898 = vsel %vm895, %v876, %v888
        %v899 = vsel %vm895, %v878, %v890
        %v900 = vsel %vm895, %v880, %v892
        %v901 = vsel %vm895, %v882, %v894
        %v902 = vsel %vm895, %v884, %v872
        %v903 = vsel %vm895, %v886, %v874
        %v904 = vsel %vm895, %v888, %v876
        %v905 = vsel %vm895, %v890, %v878
        %v906 = vsel %vm895, %v892, %v880
        %v907 = vsel %vm895, %v894, %v882
        %v908 = vpack.c.bf16 %v897, %v896
        %v909 = vpack.c.bf16 %v903, %v902
        %v910 = vpack.c.bf16 %v899, %v898
        %v911 = vpack.c.bf16 %v905, %v904
        %v912 = vpack.c.bf16 %v901, %v900
        %v913 = vpack.c.bf16 %v907, %v906
        %v920 = vunpack.c.l.b16 %v472
        %v921 = vunpack.c.h.b16 %v472
        %v922 = vunpack.c.l.b16 %v473
        %v923 = vunpack.c.h.b16 %v473
        %v924 = vunpack.c.l.b16 %v474
        %v925 = vunpack.c.h.b16 %v474
        %v926 = vunpack.c.l.b16 %v475
        %v927 = vunpack.c.h.b16 %v475
        %v928 = vunpack.c.l.b16 %v476
        %v929 = vunpack.c.h.b16 %v476
        %v930 = vunpack.c.l.b16 %v477
        %v931 = vunpack.c.h.b16 %v477
        %v932 = vpack.c.b16 %v922, %v920
        %v933 = vpack.c.b16 %v923, %v921
        %v934 = vpack.c.b16 %v926, %v924
        %v935 = vpack.c.b16 %v927, %v925
        %v936 = vpack.c.b16 %v930, %v928
        %v937 = vpack.c.b16 %v931, %v929
        %v944 = vld [vmem:[%s5] sm:$0xff]
        %v945 = vld [vmem:[%s5 + $0x8] sm:$0xff]
        %v946 = vld [vmem:[%s5 + $0x10] sm:$0xff]
        %v947 = vld [vmem:[%s5 + $0x18] sm:$0xff]
        %v948 = vld [vmem:[%s5 + $0x20] sm:$0xff]
        %v949 = vld [vmem:[%s5 + $0x28] sm:$0xff]
        %v950 = vld [vmem:[%s5 + $0x30] sm:$0xff]
        %v951 = vld [vmem:[%s5 + $0x38] sm:$0xff]
        %v952 = vld [vmem:[%s5 + $0x40] sm:$0xff]
        %v953 = vld [vmem:[%s5 + $0x48] sm:$0xff]
        %v954 = vld [vmem:[%s5 + $0x50] sm:$0xff]
        %v955 = vld [vmem:[%s5 + $0x58] sm:$0xff]
        %v956 = vld [vmem:[%s6] sm:$0xff]
        %v957 = vld [vmem:[%s6 + $0x8] sm:$0xff]
        %v958 = vld [vmem:[%s6 + $0x10] sm:$0xff]
        %v959 = vld [vmem:[%s6 + $0x18] sm:$0xff]
        %v960 = vld [vmem:[%s6 + $0x20] sm:$0xff]
        %v961 = vld [vmem:[%s6 + $0x28] sm:$0xff]
        %963 = vset.pattern.permute.xlu0 0
        %964 = vperm.xlu0 %963, %v956
        %v965 = vpop.permute.xlu0 %964
        %968 = vset.pattern.permute.xlu0 0
        %969 = vperm.xlu0 %968, %v957
        %v970 = vpop.permute.xlu0 %969
        %973 = vset.pattern.permute.xlu0 0
        %974 = vperm.xlu0 %973, %v958
        %v975 = vpop.permute.xlu0 %974
        %978 = vset.pattern.permute.xlu0 0
        %979 = vperm.xlu0 %978, %v959
        %v980 = vpop.permute.xlu0 %979
        %983 = vset.pattern.permute.xlu0 0
        %984 = vperm.xlu0 %983, %v960
        %v985 = vpop.permute.xlu0 %984
        %988 = vset.pattern.permute.xlu0 0
        %989 = vperm.xlu0 %988, %v961
        %v990 = vpop.permute.xlu0 %989
        %v1004 = vunpack.c.l.b16 %v944
        %v1005 = vunpack.c.h.b16 %v944
        %v1006 = vunpack.c.l.b16 %v945
        %v1007 = vunpack.c.h.b16 %v945
        %v1008 = vunpack.c.l.b16 %v946
        %v1009 = vunpack.c.h.b16 %v946
        %v1010 = vunpack.c.l.b16 %v947
        %v1011 = vunpack.c.h.b16 %v947
        %v1012 = vunpack.c.l.b16 %v948
        %v1013 = vunpack.c.h.b16 %v948
        %v1014 = vunpack.c.l.b16 %v949
        %v1015 = vunpack.c.h.b16 %v949
        %v1016 = vunpack.c.l.b16 %v950
        %v1017 = vunpack.c.h.b16 %v950
        %v1018 = vunpack.c.l.b16 %v951
        %v1019 = vunpack.c.h.b16 %v951
        %v1020 = vunpack.c.l.b16 %v952
        %v1021 = vunpack.c.h.b16 %v952
        %v1022 = vunpack.c.l.b16 %v953
        %v1023 = vunpack.c.h.b16 %v953
        %v1024 = vunpack.c.l.b16 %v954
        %v1025 = vunpack.c.h.b16 %v954
        %v1026 = vunpack.c.l.b16 %v955
        %v1027 = vunpack.c.h.b16 %v955
        %v1028 = vpack.c.b16 %v1008, %v1004
        %v1029 = vpack.c.b16 %v1009, %v1005
        %v1030 = vpack.c.b16 %v1010, %v1006
        %v1031 = vpack.c.b16 %v1011, %v1007
        %v1032 = vpack.c.b16 %v1016, %v1012
        %v1033 = vpack.c.b16 %v1017, %v1013
        %v1034 = vpack.c.b16 %v1018, %v1014
        %v1035 = vpack.c.b16 %v1019, %v1015
        %v1036 = vpack.c.b16 %v1024, %v1020
        %v1037 = vpack.c.b16 %v1025, %v1021
        %v1038 = vpack.c.b16 %v1026, %v1022
        %v1039 = vpack.c.b16 %v1027, %v1023
        %vm1049 = vcmask 785408
        %v1051 = vsel %vm1049, %v1031, 0
        %v1054 = vsel %vm1049, %v1035, 0
        %v1057 = vsel %vm1049, %v1039, 0
        %1059 = vmatprep.subr.bf16.mxu0 %v933
        %1060 = vmatpush1.bf16.msra.mxu0 %v932
        %1061 = vmatprep.subr.bf16.mxu0 %v935
        %1062 = vmatpush1.bf16.msra.mxu0 %v934
        %1063 = vmatprep.subr.bf16.mxu0 %v937
        %1064 = vmatpush1.bf16.msra.mxu0 %v936
        %1065 = vmatprep.subr.bf16.mxu0 %v565
        %1066 = vmatpush1.bf16.msra.mxu0 %v564
        %1067 = vmatprep.subr.bf16.mxu0 %v567
        %1068 = vmatpush1.bf16.msra.mxu0 %v566
        %1069 = vmatprep.subr.bf16.mxu0 %v569
        %1070 = vmatpush1.bf16.msra.mxu0 %v568
        %1071 = vmatprep.subr.bf16.mxu0 %v608
        %1072 = vmatpush1.bf16.msra.mxu0 %v607
        %1073 = vmatprep.subr.bf16.mxu0 %v610
        %1074 = vmatpush1.bf16.msra.mxu0 %v609
        %1075 = vmatprep.subr.bf16.mxu0 %v612
        %1076 = vmatpush1.bf16.msra.mxu0 %v611
        %1077 = vmatprep.subr.bf16.mxu0 %v651
        %1078 = vmatpush1.bf16.msra.mxu0 %v650
        %1079 = vmatprep.subr.bf16.mxu0 %v653
        %1080 = vmatpush1.bf16.msra.mxu0 %v652
        %1081 = vmatprep.subr.bf16.mxu0 %v655
        %1082 = vmatpush1.bf16.msra.mxu0 %v654
        %1083 = vmatprep.subr.bf16.mxu0 %v694
        %1084 = vmatpush1.bf16.msra.mxu0 %v693
        %1085 = vmatprep.subr.bf16.mxu0 %v696
        %1086 = vmatpush1.bf16.msra.mxu0 %v695
        %1087 = vmatprep.subr.bf16.mxu0 %v698
        %1088 = vmatpush1.bf16.msra.mxu0 %v697
        %1089 = vmatprep.subr.bf16.mxu0 %v737
        %1090 = vmatpush1.bf16.msra.mxu0 %v736
        %1091 = vmatprep.mubr.bf16.mxu0 %v1029
        %1092 = vmatmul.mubr.bf16.gmra.mrb[0].mxu0 %v1028
        %v1093 = vpop.f32.mrb[0].mxu0
        %v1094 = vadd.f32 %v965, %v1093
        %v1095 = vpop.f32.mrb[0].mxu0
        %v1096 = vadd.f32 %v965, %v1095
        %v1097 = vpop.f32.mrb[0].mxu0
        %v1098 = vadd.f32 %v970, %v1097
        %v1099 = vpop.f32.mrb[0].mxu0
        %v1100 = vadd.f32 %v970, %v1099
        %1101 = vmatprep.mubr.bf16.mxu0 %v1033
        %1102 = vmatmul.mubr.bf16.gmra.mrb[0].mxu0 %v1032
        %v1103 = vpop.f32.mrb[0].mxu0
        %v1104 = vadd.f32 %v975, %v1103
        %v1105 = vpop.f32.mrb[0].mxu0
        %v1106 = vadd.f32 %v975, %v1105
        %v1107 = vpop.f32.mrb[0].mxu0
        %v1108 = vadd.f32 %v980, %v1107
        %v1109 = vpop.f32.mrb[0].mxu0
        %v1110 = vadd.f32 %v980, %v1109
        %1111 = vmatprep.mubr.bf16.mxu0 %v1037
        %1112 = vmatmul.mubr.bf16.gmra.mrb[0].mxu0 %v1036
        %v1113 = vpop.f32.mrb[0].mxu0
        %v1114 = vadd.f32 %v985, %v1113
        %v1115 = vpop.f32.mrb[0].mxu0
        %v1116 = vadd.f32 %v985, %v1115
        %v1117 = vpop.f32.mrb[0].mxu0
        %v1118 = vadd.f32 %v990, %v1117
        %v1119 = vpop.f32.mrb[0].mxu0
        %v1120 = vadd.f32 %v990, %v1119
        %1121 = vdwg.mxu0
        %1122 = vmatprep.subr.bf16.mxu0 %v739
        %1123 = vmatpush1.bf16.msra.mxu0 %v738
        %1124 = vmatprep.subr.bf16.mxu0 %v741
        %1125 = vmatpush1.bf16.msra.mxu0 %v740
        %1126 = vmatprep.subr.bf16.mxu0 %v780
        %1127 = vmatpush1.bf16.msra.mxu0 %v779
        %1128 = vmatprep.subr.bf16.mxu0 %v782
        %1129 = vmatpush1.bf16.msra.mxu0 %v781
        %1130 = vmatprep.subr.bf16.mxu0 %v784
        %1131 = vmatpush1.bf16.msra.mxu0 %v783
        %1132 = vmatprep.subr.bf16.mxu0 %v823
        %1133 = vmatpush1.bf16.msra.mxu0 %v822
        %1134 = vmatprep.subr.bf16.mxu0 %v825
        %1135 = vmatpush1.bf16.msra.mxu0 %v824
        %1136 = vmatprep.subr.bf16.mxu0 %v827
        %1137 = vmatpush1.bf16.msra.mxu0 %v826
        %1138 = vmatprep.subr.bf16.mxu0 %v866
        %1139 = vmatpush1.bf16.msra.mxu0 %v865
        %1140 = vmatprep.subr.bf16.mxu0 %v868
        %1141 = vmatpush1.bf16.msra.mxu0 %v867
        %1142 = vmatprep.subr.bf16.mxu0 %v870
        %1143 = vmatpush1.bf16.msra.mxu0 %v869
        %1144 = vmatprep.subr.bf16.mxu0 %v909
        %1145 = vmatpush1.bf16.msra.mxu0 %v908
        %1146 = vmatprep.subr.bf16.mxu0 %v911
        %1147 = vmatpush1.bf16.msra.mxu0 %v910
        %1148 = vmatprep.subr.bf16.mxu0 %v913
        %1149 = vmatpush1.bf16.msra.mxu0 %v912
        %1150 = vmatprep.subr.bf16.mxu0 0
        %1151 = vmatpush1.bf16.msra.mxu0 0
        %1152 = vmatprep.subr.bf16.mxu0 0
        %1153 = vmatpush1.bf16.msra.mxu0 0
        %1154 = vmatprep.mubr.bf16.mxu0 %v1051
        %1155 = vmatmul.mubr.bf16.gmra.mrb[0].mxu0 %v1030
        %v1156 = vpop.f32.mrb[0].mxu0
        %v1157 = vadd.f32 %v1094, %v1156
        %v1158 = vpop.f32.mrb[0].mxu0
        %v1159 = vadd.f32 %v1096, %v1158
        %v1160 = vpop.f32.mrb[0].mxu0
        %v1161 = vadd.f32 %v1098, %v1160
        %v1162 = vpop.f32.mrb[0].mxu0
        %v1163 = vadd.f32 %v1100, %v1162
        %1164 = vmatprep.mubr.bf16.mxu0 %v1054
        %1165 = vmatmul.mubr.bf16.gmra.mrb[0].mxu0 %v1034
        %v1166 = vpop.f32.mrb[0].mxu0
        %v1167 = vadd.f32 %v1104, %v1166
        %v1168 = vpop.f32.mrb[0].mxu0
        %v1169 = vadd.f32 %v1106, %v1168
        %v1170 = vpop.f32.mrb[0].mxu0
        %v1171 = vadd.f32 %v1108, %v1170
        %v1172 = vpop.f32.mrb[0].mxu0
        %v1173 = vadd.f32 %v1110, %v1172
        %1174 = vmatprep.mubr.bf16.mxu0 %v1057
        %1175 = vmatmul.mubr.bf16.gmra.mrb[0].mxu0 %v1038
        %v1176 = vpop.f32.mrb[0].mxu0
        %v1177 = vadd.f32 %v1114, %v1176
        %v1178 = vpop.f32.mrb[0].mxu0
        %v1179 = vadd.f32 %v1116, %v1178
        %v1180 = vpop.f32.mrb[0].mxu0
        %v1181 = vadd.f32 %v1118, %v1180
        %v1182 = vpop.f32.mrb[0].mxu0
        %v1183 = vadd.f32 %v1120, %v1182
        %1184 = vdwg.mxu0
        %v1185 = vmax.f32 %v1157, 0.0
        %v1186 = vmax.f32 %v1159, 0.0
        %v1187 = vmax.f32 %v1161, 0.0
        %v1188 = vmax.f32 %v1163, 0.0
        %v1189 = vmax.f32 %v1167, 0.0
        %v1190 = vmax.f32 %v1169, 0.0
        %v1191 = vmax.f32 %v1171, 0.0
        %v1192 = vmax.f32 %v1173, 0.0
        %v1193 = vmax.f32 %v1177, 0.0
        %v1194 = vmax.f32 %v1179, 0.0
        %v1195 = vmax.f32 %v1181, 0.0
        %v1196 = vmax.f32 %v1183, 0.0
        %v1198 = vlaneseq
        %v1199 = vshrl.u32 %v1198, 7
        %v1200 = vsub.s32 0, %v1199
        %v1201 = vrot.slane %v480, %v1200
        %v1202 = vlaneseq
        %v1203 = vshrl.u32 %v1202, 7
        %v1204 = vsub.s32 1, %v1203
        %v1205 = vrot.slane %v480, %v1204
        %v1208 = vmul.f32 %v1185, %v1201
        %v1209 = vmul.f32 %v1186, %v1205
        %v1210 = vmul.f32 %v1187, %v1201
        %v1211 = vmul.f32 %v1188, %v1205
        %v1212 = vmul.f32 %v1189, %v1201
        %v1213 = vmul.f32 %v1190, %v1205
        %v1214 = vmul.f32 %v1191, %v1201
        %v1215 = vmul.f32 %v1192, %v1205
        %v1216 = vmul.f32 %v1193, %v1201
        %v1217 = vmul.f32 %v1194, %v1205
        %v1218 = vmul.f32 %v1195, %v1201
        %v1219 = vmul.f32 %v1196, %v1205
        %1220 = vrot.lane.b32.xlu0 %v1208, 5
        %v1221 = vpop.permute.xlu0 %1220
        %1222 = vrot.lane.b32.xlu0 %v1210, 5
        %v1223 = vpop.permute.xlu0 %1222
        %1224 = vrot.lane.b32.xlu0 %v1212, 5
        %v1225 = vpop.permute.xlu0 %1224
        %1226 = vrot.lane.b32.xlu0 %v1214, 5
        %v1227 = vpop.permute.xlu0 %1226
        %1228 = vrot.lane.b32.xlu0 %v1216, 5
        %v1229 = vpop.permute.xlu0 %1228
        %1230 = vrot.lane.b32.xlu0 %v1218, 5
        %v1231 = vpop.permute.xlu0 %1230
        %1232 = vrot.lane.b32.xlu0 %v1209, 5
        %v1233 = vpop.permute.xlu0 %1232
        %1234 = vrot.lane.b32.xlu0 %v1211, 5
        %v1235 = vpop.permute.xlu0 %1234
        %1236 = vrot.lane.b32.xlu0 %v1213, 5
        %v1237 = vpop.permute.xlu0 %1236
        %1238 = vrot.lane.b32.xlu0 %v1215, 5
        %v1239 = vpop.permute.xlu0 %1238
        %1240 = vrot.lane.b32.xlu0 %v1217, 5
        %v1241 = vpop.permute.xlu0 %1240
        %1242 = vrot.lane.b32.xlu0 %v1219, 5
        %v1243 = vpop.permute.xlu0 %1242
        %vm1244 = vcmp.lt.s32.totalorder %v550, 5
        %v1245 = vsel %vm1244, %v1221, %v1233
        %v1246 = vsel %vm1244, %v1223, %v1235
        %v1247 = vsel %vm1244, %v1225, %v1237
        %v1248 = vsel %vm1244, %v1227, %v1239
        %v1249 = vsel %vm1244, %v1229, %v1241
        %v1250 = vsel %vm1244, %v1231, %v1243
        %v1251 = vsel %vm1244, %v1233, %v1221
        %v1252 = vsel %vm1244, %v1235, %v1223
        %v1253 = vsel %vm1244, %v1237, %v1225
        %v1254 = vsel %vm1244, %v1239, %v1227
        %v1255 = vsel %vm1244, %v1241, %v1229
        %v1256 = vsel %vm1244, %v1243, %v1231
        %v1257 = vpack.c.bf16 %v1252, %v1251
        %v1258 = vpack.c.bf16 %v1246, %v1245
        %v1259 = vpack.c.bf16 %v1254, %v1253
        %v1260 = vpack.c.bf16 %v1248, %v1247
        %v1261 = vpack.c.bf16 %v1256, %v1255
        %v1262 = vpack.c.bf16 %v1250, %v1249
        %1263 = vrot.lane.b32.xlu0 %v1208, 4
        %v1264 = vpop.permute.xlu0 %1263
        %1265 = vrot.lane.b32.xlu0 %v1210, 4
        %v1266 = vpop.permute.xlu0 %1265
        %1267 = vrot.lane.b32.xlu0 %v1212, 4
        %v1268 = vpop.permute.xlu0 %1267
        %1269 = vrot.lane.b32.xlu0 %v1214, 4
        %v1270 = vpop.permute.xlu0 %1269
        %1271 = vrot.lane.b32.xlu0 %v1216, 4
        %v1272 = vpop.permute.xlu0 %1271
        %1273 = vrot.lane.b32.xlu0 %v1218, 4
        %v1274 = vpop.permute.xlu0 %1273
        %1275 = vrot.lane.b32.xlu0 %v1209, 4
        %v1276 = vpop.permute.xlu0 %1275
        %1277 = vrot.lane.b32.xlu0 %v1211, 4
        %v1278 = vpop.permute.xlu0 %1277
        %1279 = vrot.lane.b32.xlu0 %v1213, 4
        %v1280 = vpop.permute.xlu0 %1279
        %1281 = vrot.lane.b32.xlu0 %v1215, 4
        %v1282 = vpop.permute.xlu0 %1281
        %1283 = vrot.lane.b32.xlu0 %v1217, 4
        %v1284 = vpop.permute.xlu0 %1283
        %1285 = vrot.lane.b32.xlu0 %v1219, 4
        %v1286 = vpop.permute.xlu0 %1285
        %vm1287 = vcmp.lt.s32.totalorder %v550, 4
        %v1288 = vsel %vm1287, %v1264, %v1276
        %v1289 = vsel %vm1287, %v1266, %v1278
        %v1290 = vsel %vm1287, %v1268, %v1280
        %v1291 = vsel %vm1287, %v1270, %v1282
        %v1292 = vsel %vm1287, %v1272, %v1284
        %v1293 = vsel %vm1287, %v1274, %v1286
        %v1294 = vsel %vm1287, %v1276, %v1264
        %v1295 = vsel %vm1287, %v1278, %v1266
        %v1296 = vsel %vm1287, %v1280, %v1268
        %v1297 = vsel %vm1287, %v1282, %v1270
        %v1298 = vsel %vm1287, %v1284, %v1272
        %v1299 = vsel %vm1287, %v1286, %v1274
        %v1300 = vpack.c.bf16 %v1295, %v1294
        %v1301 = vpack.c.bf16 %v1289, %v1288
        %v1302 = vpack.c.bf16 %v1297, %v1296
        %v1303 = vpack.c.bf16 %v1291, %v1290
        %v1304 = vpack.c.bf16 %v1299, %v1298
        %v1305 = vpack.c.bf16 %v1293, %v1292
        %v1306 = vld [vmem:[%s7] sm:$0xf]
        %v1307 = vld [vmem:[%s7 + $0x4] sm:$0xf]
        %v1308 = vld [vmem:[%s7 + $0x8] sm:$0xf]
        %v1309 = vld [vmem:[%s7 + $0xc] sm:$0xf]
        %v1310 = vld [vmem:[%s7 + $0x10] sm:$0xf]
        %v1311 = vld [vmem:[%s7 + $0x14] sm:$0x7]
        %v1312 = vld [vmem:[%s8] sm:$0xff]
        %v1313 = vld [vmem:[%s8 + $0x8] sm:$0xff]
        %v1314 = vld [vmem:[%s8 + $0x10] sm:$0xff]
        %v1315 = vld [vmem:[%s8 + $0x18] sm:$0xff]
        %v1316 = vld [vmem:[%s8 + $0x20] sm:$0xff]
        %v1317 = vld [vmem:[%s8 + $0x28] sm:$0x3f]
        %1319 = vset.pattern.permute.xlu0 0
        %1320 = vperm.xlu0 %1319, %v1312
        %v1321 = vpop.permute.xlu0 %1320
        %1324 = vset.pattern.permute.xlu0 0
        %1325 = vperm.xlu0 %1324, %v1313
        %v1326 = vpop.permute.xlu0 %1325
        %1329 = vset.pattern.permute.xlu0 0
        %1330 = vperm.xlu0 %1329, %v1314
        %v1331 = vpop.permute.xlu0 %1330
        %1334 = vset.pattern.permute.xlu0 0
        %1335 = vperm.xlu0 %1334, %v1315
        %v1336 = vpop.permute.xlu0 %1335
        %1339 = vset.pattern.permute.xlu0 0
        %1340 = vperm.xlu0 %1339, %v1316
        %v1341 = vpop.permute.xlu0 %1340
        %1344 = vset.pattern.permute.xlu0 0
        %1345 = vperm.xlu0 %1344, %v1317
        %v1346 = vpop.permute.xlu0 %1345
        %v1354 = vunpack.c.l.b16 %v1306
        %v1355 = vunpack.c.l.b16 %v1307
        %v1356 = vunpack.c.l.b16 %v1308
        %v1357 = vunpack.c.l.b16 %v1309
        %v1358 = vunpack.c.l.b16 %v1310
        %v1359 = vunpack.c.l.b16 %v1311
        %v1360 = vpack.c.b16 %v1355, %v1354
        %v1361 = vpack.c.b16 %v1357, %v1356
        %v1362 = vpack.c.b16 %v1359, %v1358
        %v1364 = vsel %vm1049, %v1360, 0
        %v1367 = vsel %vm1049, %v1361, 0
        %v1370 = vsel %vm1049, %v1362, 0
        %1372 = vmatprep.subr.bf16.mxu0 %v1258
        %1373 = vmatpush1.bf16.msra.mxu0 %v1257
        %1374 = vmatprep.subr.bf16.mxu0 %v1260
        %1375 = vmatpush1.bf16.msra.mxu0 %v1259
        %1376 = vmatprep.subr.bf16.mxu0 %v1262
        %1377 = vmatpush1.bf16.msra.mxu0 %v1261
        %1378 = vmatprep.subr.bf16.mxu0 %v1301
        %1379 = vmatpush1.bf16.msra.mxu0 %v1300
        %1380 = vmatprep.subr.bf16.mxu0 %v1303
        %1381 = vmatpush1.bf16.msra.mxu0 %v1302
        %1382 = vmatprep.subr.bf16.mxu0 %v1305
        %1383 = vmatpush1.bf16.msra.mxu0 %v1304
        %1384 = vmatprep.subr.bf16.mxu0 0
        %1385 = vmatpush1.bf16.msra.mxu0 0
        %1386 = vmatprep.subr.bf16.mxu0 0
        %1387 = vmatpush1.bf16.msra.mxu0 0
        %1388 = vmatprep.subr.bf16.mxu0 0
        %1389 = vmatpush1.bf16.msra.mxu0 0
        %1390 = vmatprep.subr.bf16.mxu0 0
        %1391 = vmatpush1.bf16.msra.mxu0 0
        %1392 = vmatprep.subr.bf16.mxu0 0
        %1393 = vmatpush1.bf16.msra.mxu0 0
        %1394 = vmatprep.subr.bf16.mxu0 0
        %1395 = vmatpush1.bf16.msra.mxu0 0
        %1396 = vmatprep.subr.bf16.mxu0 0
        %1397 = vmatpush1.bf16.msra.mxu0 0
        %1398 = vmatprep.subr.bf16.mxu0 0
        %1399 = vmatpush1.bf16.msra.mxu0 0
        %1400 = vmatprep.subr.bf16.mxu0 0
        %1401 = vmatpush1.bf16.msra.mxu0 0
        %1402 = vmatprep.subr.bf16.mxu0 0
        %1403 = vmatpush1.bf16.msra.mxu0 0
        %1404 = vmatprep.mubr.bf16.mxu0 0
        %1405 = vmatmul.mubr.bf16.gmra.mrb[0].mxu0 %v1364
        %v1406 = vpop.f32.mrb[0].mxu0
        %v1407 = vadd.f32 %v1321, %v1406
        %v1408 = vpop.f32.mrb[0].mxu0
        %v1409 = vadd.f32 %v1321, %v1408
        %v1410 = vpop.f32.mrb[0].mxu0
        %v1411 = vadd.f32 %v1326, %v1410
        %v1412 = vpop.f32.mrb[0].mxu0
        %v1413 = vadd.f32 %v1326, %v1412
        %1414 = vmatprep.mubr.bf16.mxu0 0
        %1415 = vmatmul.mubr.bf16.gmra.mrb[0].mxu0 %v1367
        %v1416 = vpop.f32.mrb[0].mxu0
        %v1417 = vadd.f32 %v1331, %v1416
        %v1418 = vpop.f32.mrb[0].mxu0
        %v1419 = vadd.f32 %v1331, %v1418
        %v1420 = vpop.f32.mrb[0].mxu0
        %v1421 = vadd.f32 %v1336, %v1420
        %v1422 = vpop.f32.mrb[0].mxu0
        %v1423 = vadd.f32 %v1336, %v1422
        %1424 = vmatprep.mubr.bf16.mxu0 0
        %1425 = vmatmul.mubr.bf16.gmra.mrb[0].mxu0 %v1370
        %v1426 = vpop.f32.mrb[0].mxu0
        %v1427 = vadd.f32 %v1341, %v1426
        %v1428 = vpop.f32.mrb[0].mxu0
        %v1429 = vadd.f32 %v1341, %v1428
        %v1430 = vpop.f32.mrb[0].mxu0
        %v1431 = vadd.f32 %v1346, %v1430
        %v1432 = vpop.f32.mrb[0].mxu0
        %v1433 = vadd.f32 %v1346, %v1432
        %1434 = vdwg.mxu0
        %v1435 = vmax.f32 %v1407, 0.0
        %v1436 = vmax.f32 %v1409, 0.0
        %v1437 = vmax.f32 %v1411, 0.0
        %v1438 = vmax.f32 %v1413, 0.0
        %v1439 = vmax.f32 %v1417, 0.0
        %v1440 = vmax.f32 %v1419, 0.0
        %v1441 = vmax.f32 %v1421, 0.0
        %v1442 = vmax.f32 %v1423, 0.0
        %v1443 = vmax.f32 %v1427, 0.0
        %v1444 = vmax.f32 %v1429, 0.0
        %v1445 = vmax.f32 %v1431, 0.0
        %v1446 = vmax.f32 %v1433, 0.0
        %v1448 = vlaneseq
        %v1449 = vshrl.u32 %v1448, 7
        %v1450 = vsub.s32 0, %v1449
        %v1451 = vrot.slane %v478, %v1450
        %v1452 = vlaneseq
        %v1453 = vshrl.u32 %v1452, 7
        %v1454 = vsub.s32 1, %v1453
        %v1455 = vrot.slane %v478, %v1454
        %v1458 = vmul.f32 %v1435, %v1451
        %v1459 = vmul.f32 %v1436, %v1455
        %v1460 = vmul.f32 %v1437, %v1451
        %v1461 = vmul.f32 %v1438, %v1455
        %v1462 = vmul.f32 %v1439, %v1451
        %v1463 = vmul.f32 %v1440, %v1455
        %v1464 = vmul.f32 %v1441, %v1451
        %v1465 = vmul.f32 %v1442, %v1455
        %v1466 = vmul.f32 %v1443, %v1451
        %v1467 = vmul.f32 %v1444, %v1455
        %v1468 = vmul.f32 %v1445, %v1451
        %v1469 = vmul.f32 %v1446, %v1455
        %v1470 = vpack.c.bf16 %v1460, %v1458
        %v1471 = vpack.c.bf16 %v1461, %v1459
        %v1472 = vpack.c.bf16 %v1464, %v1462
        %v1473 = vpack.c.bf16 %v1465, %v1463
        %v1474 = vpack.c.bf16 %v1468, %v1466
        %v1475 = vpack.c.bf16 %v1469, %v1467
        %v1508 = vunpack.c.l.b16 %v481
        %v1509 = vunpack.c.l.b16 %v482
        %v1510 = vunpack.c.l.b16 %v483
        %v1511 = vunpack.c.l.b16 %v484
        %v1512 = vunpack.c.l.b16 %v485
        %v1513 = vunpack.c.l.b16 %v486
        %v1514 = vunpack.c.l.b16 %v487
        %v1515 = vunpack.c.l.b16 %v488
        %v1516 = vunpack.c.l.b16 %v489
        %v1517 = vunpack.c.l.b16 %v490
        %v1518 = vunpack.c.l.b16 %v491
        %v1519 = vunpack.c.l.b16 %v492
        %v1520 = vunpack.c.l.b16 %v493
        %v1521 = vunpack.c.l.b16 %v494
        %v1522 = vunpack.c.l.b16 %v495
        %v1523 = vunpack.c.l.b16 %v496
        %v1524 = vunpack.c.l.b16 %v497
        %v1525 = vunpack.c.l.b16 %v498
        %v1526 = vunpack.c.l.b16 %v499
        %v1527 = vunpack.c.l.b16 %v500
        %v1528 = vunpack.c.l.b16 %v501
        %v1529 = vunpack.c.l.b16 %v502
        %v1530 = vunpack.c.l.b16 %v503
        %v1531 = vunpack.c.l.b16 %v504
        %v1532 = vunpack.c.l.b16 %v505
        %v1533 = vunpack.c.l.b16 %v506
        %v1534 = vunpack.c.l.b16 %v507
        %v1535 = vunpack.c.l.b16 %v508
        %v1536 = vunpack.c.l.b16 %v509
        %v1537 = vunpack.c.l.b16 %v510
        %v1538 = vunpack.c.l.b16 %v511
        %v1539 = vunpack.c.l.b16 %v512
        %v1540 = vpack.c.b16 %v1509, %v1508
        %v1541 = vpack.c.b16 %v1511, %v1510
        %v1542 = vpack.c.b16 %v1513, %v1512
        %v1543 = vpack.c.b16 %v1515, %v1514
        %v1544 = vpack.c.b16 %v1517, %v1516
        %v1545 = vpack.c.b16 %v1519, %v1518
        %v1546 = vpack.c.b16 %v1521, %v1520
        %v1547 = vpack.c.b16 %v1523, %v1522
        %v1548 = vpack.c.b16 %v1525, %v1524
        %v1549 = vpack.c.b16 %v1527, %v1526
        %v1550 = vpack.c.b16 %v1529, %v1528
        %v1551 = vpack.c.b16 %v1531, %v1530
        %v1552 = vpack.c.b16 %v1533, %v1532
        %v1553 = vpack.c.b16 %v1535, %v1534
        %v1554 = vpack.c.b16 %v1537, %v1536
        %v1555 = vpack.c.b16 %v1539, %v1538
        %1572 = vmatprep.subr.bf16.mxu0 0
        %1573 = vmatpush1.bf16.msra.mxu0 %v1540
        %1574 = vmatprep.subr.bf16.mxu0 0
        %1575 = vmatpush1.bf16.msra.mxu0 %v1541
        %1576 = vmatprep.subr.bf16.mxu0 0
        %1577 = vmatpush1.bf16.msra.mxu0 %v1542
        %1578 = vmatprep.subr.bf16.mxu0 0
        %1579 = vmatpush1.bf16.msra.mxu0 %v1543
        %1580 = vmatprep.subr.bf16.mxu0 0
        %1581 = vmatpush1.bf16.msra.mxu0 %v1544
        %1582 = vmatprep.subr.bf16.mxu0 0
        %1583 = vmatpush1.bf16.msra.mxu0 %v1545
        %1584 = vmatprep.subr.bf16.mxu0 0
        %1585 = vmatpush1.bf16.msra.mxu0 %v1546
        %1586 = vmatprep.subr.bf16.mxu0 0
        %1587 = vmatpush1.bf16.msra.mxu0 %v1547
        %1588 = vmatprep.subr.bf16.mxu0 0
        %1589 = vmatpush1.bf16.msra.mxu0 %v1548
        %1590 = vmatprep.subr.bf16.mxu0 0
        %1591 = vmatpush1.bf16.msra.mxu0 %v1549
        %1592 = vmatprep.subr.bf16.mxu0 0
        %1593 = vmatpush1.bf16.msra.mxu0 %v1550
        %1594 = vmatprep.subr.bf16.mxu0 0
        %1595 = vmatpush1.bf16.msra.mxu0 %v1551
        %1596 = vmatprep.subr.bf16.mxu0 0
        %1597 = vmatpush1.bf16.msra.mxu0 %v1552
        %1598 = vmatprep.subr.bf16.mxu0 0
        %1599 = vmatpush1.bf16.msra.mxu0 %v1553
        %1600 = vmatprep.subr.bf16.mxu0 0
        %1601 = vmatpush1.bf16.msra.mxu0 %v1554
        %1602 = vmatprep.subr.bf16.mxu0 0
        %1603 = vmatpush1.bf16.msra.mxu0 %v1555
        %1604 = vmatprep.mubr.bf16.mxu0 %v1471
        %1605 = vmatmul.mubr.bf16.gmra.mrb[0].mxu0 %v1470
        %v1606 = vpop.f32.mrb[0].mxu0
        %v1607 = vadd.f32 0.0, %v1606
        %v1608 = vpop.f32.mrb[0].mxu0
        %v1609 = vpop.f32.mrb[0].mxu0
        %v1610 = vadd.f32 0.0, %v1609
        %v1611 = vpop.f32.mrb[0].mxu0
        %1612 = vmatprep.mubr.bf16.mxu0 %v1473
        %1613 = vmatmul.mubr.bf16.gmra.mrb[0].mxu0 %v1472
        %v1614 = vpop.f32.mrb[0].mxu0
        %v1615 = vadd.f32 0.0, %v1614
        %v1616 = vpop.f32.mrb[0].mxu0
        %v1617 = vpop.f32.mrb[0].mxu0
        %v1618 = vadd.f32 0.0, %v1617
        %v1619 = vpop.f32.mrb[0].mxu0
        %1620 = vmatprep.mubr.bf16.mxu0 %v1475
        %1621 = vmatmul.mubr.bf16.gmra.mrb[0].mxu0 %v1474
        %v1622 = vpop.f32.mrb[0].mxu0
        %v1623 = vadd.f32 0.0, %v1622
        %v1624 = vpop.f32.mrb[0].mxu0
        %v1625 = vpop.f32.mrb[0].mxu0
        %v1626 = vadd.f32 0.0, %v1625
        %v1627 = vpop.f32.mrb[0].mxu0
        %1628 = vdwg.mxu0
        %v1630 = vlaneseq
        %v1631 = vshrl.u32 %v1630, 7
        %v1632 = vsub.s32 0, %v1631
        %v1633 = vrot.slane %v479, %v1632
        %v1635 = vmul.f32 %v1607, %v1633
        %v1636 = vmul.f32 %v1610, %v1633
        %v1637 = vmul.f32 %v1615, %v1633
        %v1638 = vmul.f32 %v1618, %v1633
        %v1639 = vmul.f32 %v1623, %v1633
        %v1640 = vmul.f32 %v1626, %v1633
        %v1641 = vld [vmem:[%s9] sm:$0xff]
        %v1642 = vld [vmem:[%s9 + $0x8] sm:$0xff]
        %v1643 = vld [vmem:[%s9 + $0x10] sm:$0xff]
        %v1644 = vld [vmem:[%s9 + $0x18] sm:$0xff]
        %v1645 = vld [vmem:[%s9 + $0x20] sm:$0xff]
        %v1646 = vld [vmem:[%s9 + $0x28] sm:$0x3f]
        %v1647 = vld [vmem:[%s10] sm:$0xff]
        %v1648 = vld [vmem:[%s10 + $0x8] sm:$0xff]
        %v1649 = vld [vmem:[%s10 + $0x10] sm:$0xff]
        %v1650 = vld [vmem:[%s10 + $0x18] sm:$0xff]
        %v1651 = vld [vmem:[%s10 + $0x20] sm:$0xff]
        %v1652 = vld [vmem:[%s10 + $0x28] sm:$0x3f]
        %1654 = vset.pattern.permute.xlu0 0
        %1655 = vperm.xlu0 %1654, %v1647
        %v1656 = vpop.permute.xlu0 %1655
        %1659 = vset.pattern.permute.xlu0 0
        %1660 = vperm.xlu0 %1659, %v1648
        %v1661 = vpop.permute.xlu0 %1660
        %1664 = vset.pattern.permute.xlu0 0
        %1665 = vperm.xlu0 %1664, %v1649
        %v1666 = vpop.permute.xlu0 %1665
        %1669 = vset.pattern.permute.xlu0 0
        %1670 = vperm.xlu0 %1669, %v1650
        %v1671 = vpop.permute.xlu0 %1670
        %1674 = vset.pattern.permute.xlu0 0
        %1675 = vperm.xlu0 %1674, %v1651
        %v1676 = vpop.permute.xlu0 %1675
        %1679 = vset.pattern.permute.xlu0 0
        %1680 = vperm.xlu0 %1679, %v1652
        %v1681 = vpop.permute.xlu0 %1680
        %vm1683 = vcmask 375808
        %v1685 = vsel %vm1683, %v1641, 0
        %v1688 = vsel %vm1683, %v1642, 0
        %v1691 = vsel %vm1683, %v1643, 0
        %v1694 = vsel %vm1683, %v1644, 0
        %v1697 = vsel %vm1683, %v1645, 0
        %v1700 = vsel %vm1683, %v1646, 0
        %vm1702 = vcmask 1045504
        %v1704 = vsel %vm1702, %v1640, 0
        %1706 = vmatprep.subr.mxu0 0.0
        %1707 = vmatpush1.msra.mxu0 %v1635
        %1708 = vmatprep.subr.mxu0 0.0
        %1709 = vmatpush1.msra.mxu0 %v1636
        %1710 = vmatprep.subr.mxu0 0.0
        %1711 = vmatpush1.msra.mxu0 %v1637
        %1712 = vmatprep.subr.mxu0 0.0
        %1713 = vmatpush1.msra.mxu0 %v1638
        %1714 = vmatprep.subr.mxu0 0.0
        %1715 = vmatpush1.msra.mxu0 %v1639
        %1716 = vmatprep.subr.mxu0 0.0
        %1717 = vmatpush1.msra.mxu0 %v1704
        %1718 = vmatprep.subr.mxu0 0.0
        %1719 = vmatpush1.msra.mxu0 0.0
        %1720 = vmatprep.subr.mxu0 0.0
        %1721 = vmatpush1.msra.mxu0 0.0
        %1722 = vmatprep.subr.mxu0 0.0
        %1723 = vmatpush1.msra.mxu0 0.0
        %1724 = vmatprep.subr.mxu0 0.0
        %1725 = vmatpush1.msra.mxu0 0.0
        %1726 = vmatprep.subr.mxu0 0.0
        %1727 = vmatpush1.msra.mxu0 0.0
        %1728 = vmatprep.subr.mxu0 0.0
        %1729 = vmatpush1.msra.mxu0 0.0
        %1730 = vmatprep.subr.mxu0 0.0
        %1731 = vmatpush1.msra.mxu0 0.0
        %1732 = vmatprep.subr.mxu0 0.0
        %1733 = vmatpush1.msra.mxu0 0.0
        %1734 = vmatprep.subr.mxu0 0.0
        %1735 = vmatpush1.msra.mxu0 0.0
        %1736 = vmatprep.subr.mxu0 0.0
        %1737 = vmatpush1.msra.mxu0 0.0
        %1738 = vmatprep.subr.mxu0 0.0
        %1739 = vmatpush1.msra.mxu0 0.0
        %1740 = vmatprep.subr.mxu0 0.0
        %1741 = vmatpush1.msra.mxu0 0.0
        %1742 = vmatprep.subr.mxu0 0.0
        %1743 = vmatpush1.msra.mxu0 0.0
        %1744 = vmatprep.subr.mxu0 0.0
        %1745 = vmatpush1.msra.mxu0 0.0
        %1746 = vmatprep.subr.mxu0 0.0
        %1747 = vmatpush1.msra.mxu0 0.0
        %1748 = vmatprep.subr.mxu0 0.0
        %1749 = vmatpush1.msra.mxu0 0.0
        %1750 = vmatprep.subr.mxu0 0.0
        %1751 = vmatpush1.msra.mxu0 0.0
        %1752 = vmatprep.subr.mxu0 0.0
        %1753 = vmatpush1.msra.mxu0 0.0
        %1754 = vmatprep.subr.mxu0 0.0
        %1755 = vmatpush1.msra.mxu0 0.0
        %1756 = vmatprep.subr.mxu0 0.0
        %1757 = vmatpush1.msra.mxu0 0.0
        %1758 = vmatprep.subr.mxu0 0.0
        %1759 = vmatpush1.msra.mxu0 0.0
        %1760 = vmatprep.subr.mxu0 0.0
        %1761 = vmatpush1.msra.mxu0 0.0
        %1762 = vmatprep.subr.mxu0 0.0
        %1763 = vmatpush1.msra.mxu0 0.0
        %1764 = vmatprep.subr.mxu0 0.0
        %1765 = vmatpush1.msra.mxu0 0.0
        %1766 = vmatprep.subr.mxu0 0.0
        %1767 = vmatpush1.msra.mxu0 0.0
        %1768 = vmatprep.subr.mxu0 0.0
        %1769 = vmatpush1.msra.mxu0 0.0
        %1770 = vmatprep.mubr.f32.mxu0 0.0
        %1771 = vmatmul.mubr.f32.gmra.mrb[0].mxu0 %v1685
        %v1772 = vpop.f32.mrb[0].mxu0
        %v1773 = vadd.f32 %v1656, %v1772
        %v1774 = vpop.f32.mrb[0].mxu0
        %1775 = vmatprep.mubr.f32.mxu0 0.0
        %1776 = vmatmul.mubr.f32.gmra.mrb[0].mxu0 %v1688
        %v1777 = vpop.f32.mrb[0].mxu0
        %v1778 = vadd.f32 %v1661, %v1777
        %v1779 = vpop.f32.mrb[0].mxu0
        %1780 = vmatprep.mubr.f32.mxu0 0.0
        %1781 = vmatmul.mubr.f32.gmra.mrb[0].mxu0 %v1691
        %v1782 = vpop.f32.mrb[0].mxu0
        %v1783 = vadd.f32 %v1666, %v1782
        %v1784 = vpop.f32.mrb[0].mxu0
        %1785 = vmatprep.mubr.f32.mxu0 0.0
        %1786 = vmatmul.mubr.f32.gmra.mrb[0].mxu0 %v1694
        %v1787 = vpop.f32.mrb[0].mxu0
        %v1788 = vadd.f32 %v1671, %v1787
        %v1789 = vpop.f32.mrb[0].mxu0
        %1790 = vmatprep.mubr.f32.mxu0 0.0
        %1791 = vmatmul.mubr.f32.gmra.mrb[0].mxu0 %v1697
        %v1792 = vpop.f32.mrb[0].mxu0
        %v1793 = vadd.f32 %v1676, %v1792
        %v1794 = vpop.f32.mrb[0].mxu0
        %1795 = vmatprep.mubr.f32.mxu0 0.0
        %1796 = vmatmul.mubr.f32.gmra.mrb[0].mxu0 %v1700
        %v1797 = vpop.f32.mrb[0].mxu0
        %v1798 = vadd.f32 %v1681, %v1797
        %v1799 = vpop.f32.mrb[0].mxu0
        %1800 = vdwg.mxu0
        %vm1801 = vcmask 130048
        %1802 = vst.msk [vmem:[%s470] sm:$0xff] %vm1801, %v1773
        %1803 = vst.msk [vmem:[%s470 + $0x8] sm:$0xff] %vm1801, %v1778
        %1804 = vst.msk [vmem:[%s470 + $0x10] sm:$0xff] %vm1801, %v1783
        %1805 = vst.msk [vmem:[%s470 + $0x18] sm:$0xff] %vm1801, %v1788
        %1806 = vst.msk [vmem:[%s470 + $0x20] sm:$0xff] %vm1801, %v1793
        %vm1807 = vcmask 128000
        %1808 = vst.msk [vmem:[%s470 + $0x28] sm:$0x3f] %vm1807, %v1798
        %p1809 = scmp.lt.s32.totalorder %s28, 2
        %s1810 = scalar_select %p1809, %s28, 2
        %s1811 = smul.addr %s1810, 6
        %s1812 = smul.addr %s1811, 8
        %s1813 = scalar_lea.vmem %s11, %s1812
        // Predicated region
        $region77: #{tpu_custom_call.1} parent=63 // pred_check
          %p1814 = pneg %p292
        $region78: #{tpu_custom_call.1} parent=63 // pred_check_branch
          %1816 = sbr.rel (%p1814) target = $region80
        $region79: #{tpu_custom_call.1} parent=63 // pred_region
          _
        $region80: #{tpu_custom_call.1} parent=63 // pred_fallthru
          _
      $region64: #{tpu_custom_call.1} parent=5 // pred_fallthru
        _
      %p1817 = scmp.le.s32.totalorder 2, %s23
      // Predicated region
      $region81: #{tpu_custom_call.1} parent=5 // pred_check
        %p1818 = pneg %p1817
      $region82: #{tpu_custom_call.1} parent=5 // pred_check_branch
        %1820 = sbr.rel (%p1818) target = $region84
      $region83: #{tpu_custom_call.1} parent=5 // pred_region
        %s1821 = ssub.s32 %s23, 2
        // Predicated region
        $region85: #{tpu_custom_call.1} parent=83 // pred_check
          %p1822 = pneg %p298
        $region86: #{tpu_custom_call.1} parent=83 // pred_check_branch
          %1824 = sbr.rel (%p1822) target = $region88
        $region87: #{tpu_custom_call.1} parent=83 // pred_region
          %p1825 = scmp.lt.s32.totalorder %s29, 2
          %s1826 = scalar_select %p1825, %s29, 2
          %s1827 = smul.addr %s1826, 6
          %s1828 = smul.addr %s1827, 8
          %s1829 = scalar_lea.vmem %s11, %s1828
        $region88: #{tpu_custom_call.1} parent=83 // pred_fallthru
          _
      $region84: #{tpu_custom_call.1} parent=5 // pred_fallthru
        _
    $region6: #{tpu_custom_call.1} parent=1 // loop_footer
      %s27 = sadd.s32 1, %s23
    $region7: #{tpu_custom_call.1} parent=1 // loop_footer_branch
      %22 = sbr.rel target = $region3
    $region8: #{tpu_custom_call.1} parent=1 // loop_exit
      _
    %1830 = vsyncpa [#allocation3], 1
    %s1831 = scalar_lea.sflag [#allocation3], 1
    %1832 = vsyncpa %s1831, 1
    %1833 = vsyncpa [#allocation5], 1
    %s1834 = scalar_lea.sflag [#allocation5], 1
    %1835 = vsyncpa %s1834, 1

</llo_original>
